<compile_context>
chip_gen: v6e
topology: v6e:2x2x1
jax: 0.10.0
libtpu: 0.0.40
codegen_flags: <defaults>
</compile_context>

<pallas_src>
import jax
import jax.numpy as jnp
from jax.experimental import pallas as pl
from jax.experimental.pallas import tpu as pltpu


def _graphconv(a_bf16, h_bf16, w_bf16, b_f32, *, activate, keep_bf16):
    """One GraphConv layer: act(A_hat @ H @ W + b).

    A-first ordering everywhere; every MXU operand is bf16, accumulation f32.
    Pure jnp ops only, so the same function is the bit-matched JAX reference.
    """
    ah = jnp.dot(a_bf16, h_bf16, preferred_element_type=jnp.float32)      # (N, fin)
    out = jnp.dot(ah.astype(jnp.bfloat16), w_bf16,
                  preferred_element_type=jnp.float32) + b_f32             # (N, fout)
    if activate:
        out = jnp.maximum(out, 0.0)
    if keep_bf16:
        out = out.astype(jnp.bfloat16)
    return out


def fused_gcn_kernel(a_ref, x_ref, w1_ref, b1_ref, w2_ref, b2_ref,
                     w3_ref, b3_ref, o_ref):
    """All three GraphConv layers; H stays resident (bf16) between layers."""
    a = a_ref[...]
    h = _graphconv(a, x_ref[...], w1_ref[...], b1_ref[...],
                   activate=True, keep_bf16=True)
    # dropout: eval-mode identity
    h = _graphconv(a, h, w2_ref[...], b2_ref[...],
                   activate=True, keep_bf16=True)
    # dropout: eval-mode identity
    h = _graphconv(a, h, w3_ref[...], b3_ref[...],
                   activate=False, keep_bf16=False)
    o_ref[...] = h.astype(o_ref.dtype)


def gcn_forward(a_hat, x, params):
    """Forward pass matching GCN.forward (eval mode: dropout = identity)."""
    n = a_hat.shape[0]
    (w1, b1), (w2, b2), (w3, b3) = params
    in_size = x.shape[1]
    hid1 = w1.shape[1]
    hid2 = w2.shape[1]
    out_size = w3.shape[1]

    # Lane-dense output: pad the last layer to a multiple of 128 columns
    # (zero columns contribute nothing; wrapper slices them off).
    pad_out = max(128, -(-out_size // 128) * 128)
    w3p = jnp.pad(w3, ((0, 0), (0, pad_out - out_size)))
    b3p = jnp.pad(b3, ((0, 0), (0, pad_out - out_size)))

    # bf16 for every MXU operand; biases stay f32 (added to f32 accumulators).
    a_bf16 = a_hat.astype(jnp.bfloat16)
    x_bf16 = x.astype(jnp.bfloat16)
    w1b = w1.astype(jnp.bfloat16)
    w2b = w2.astype(jnp.bfloat16)
    w3b = w3p.astype(jnp.bfloat16)

    # Advisory cost estimate for XLA scheduling around the fused call.
    flops = 0
    for fi, fo in ((in_size, hid1), (hid1, hid2), (hid2, pad_out)):
        flops += 2 * n * n * fi + 2 * n * fi * fo
    bytes_accessed = (a_bf16.size * 2 + x_bf16.size * 2
                      + w1b.size * 2 + w2b.size * 2 + w3b.size * 2
                      + b1.size * 4 + b2.size * 4 + b3p.size * 4
                      + n * pad_out * 4)

    # Explicit VMEM budget: working set + headroom, clamped to the v7x per-TC
    # physical ceiling (also lifts v5e past its 16 MiB scoped default).
    vmem_limit = int(min(64 << 20, max(4 << 20, 4 * bytes_accessed)))

    vmem_spec = pl.BlockSpec(memory_space=pltpu.MemorySpace.VMEM)

    out_pad = pl.pallas_call(
        fused_gcn_kernel,
        out_shape=jax.ShapeDtypeStruct((n, pad_out), jnp.float32),
        in_specs=[vmem_spec] * 8,
        out_specs=vmem_spec,
        compiler_params=pltpu.CompilerParams(vmem_limit_bytes=vmem_limit),
        cost_estimate=pl.CostEstimate(
            flops=flops, transcendentals=0, bytes_accessed=bytes_accessed),
    )(a_bf16, x_bf16, w1b, b1, w2b, b2, w3b, b3p)

    return out_pad[:, :out_size]


def gcn_forward_ref(a_hat, x, params):
    """Pure-JAX reference with the identical per-layer order and bf16 casts."""
    a_bf16 = a_hat.astype(jnp.bfloat16)
    h = x.astype(jnp.bfloat16)
    n_layers = len(params)
    for l, (w, b) in enumerate(params):
        last = (l == n_layers - 1)
        h = _graphconv(a_bf16, h, w.astype(jnp.bfloat16), b,
                       activate=not last, keep_bf16=not last)
    return h


def build_normalized_adjacency(key, n):
    """Dense random graph + DGL 'both' normalization (degrees clamped to >=1)."""
    adj = (jax.random.uniform(key, (n, n)) < 0.05).astype(jnp.float32)
    # adj[dst, src] = 1 if there is an edge src -> dst
    out_deg = jnp.clip(adj.sum(axis=0), 1.0, None)  # per source node
    in_deg = jnp.clip(adj.sum(axis=1), 1.0, None)   # per destination node
    return (in_deg ** -0.5)[:, None] * adj * (out_deg ** -0.5)[None, :]


def init_params(key, in_size, hid_size, out_size):
    sizes = [(in_size, hid_size), (hid_size, hid_size), (hid_size, out_size)]
    params = []
    for (fi, fo) in sizes:
        key, kw = jax.random.split(key)
        # Xavier-uniform init (matches dglnn.GraphConv default), deterministic.
        limit = (6.0 / (fi + fo)) ** 0.5
        w = jax.random.uniform(kw, (fi, fo), jnp.float32, -limit, limit)
        b = jnp.zeros((1, fo), jnp.float32)
        params.append((w, b))
    return params


if __name__ == "__main__":
    N = 256           # number of nodes in the (sub)graph
    in_size = 32
    hid_size = 64
    out_size = 16

    root = jax.random.PRNGKey(0)
    k_adj, k_feat, k_par = jax.random.split(root, 3)

    a_hat = build_normalized_adjacency(k_adj, N)
    x = jax.random.normal(k_feat, (N, in_size), jnp.float32)
    params = init_params(k_par, in_size, hid_size, out_size)

    out = gcn_forward(a_hat, x, params)
    out = jax.block_until_ready(out)

    ref = jax.block_until_ready(gcn_forward_ref(a_hat, x, params))
    assert out.shape == (N, out_size)
    assert jnp.allclose(out, ref, atol=1e-3, rtol=1e-3), "mismatch vs reference"

    print("KERNEL_OK")
</pallas_src>

<mosaic_0001>
module attributes {stable_mosaic.version = 11 : i64} {
  func.func @fused_gcn_kernel(%arg0: memref<256x256xbf16, #tpu.memory_space<vmem>>, %arg1: memref<256x32xbf16, #tpu.memory_space<vmem>>, %arg2: memref<32x64xbf16, #tpu.memory_space<vmem>>, %arg3: memref<1x64xf32, #tpu.memory_space<vmem>>, %arg4: memref<64x64xbf16, #tpu.memory_space<vmem>>, %arg5: memref<1x64xf32, #tpu.memory_space<vmem>>, %arg6: memref<64x128xbf16, #tpu.memory_space<vmem>>, %arg7: memref<1x128xf32, #tpu.memory_space<vmem>>, %arg8: memref<256x128xf32, #tpu.memory_space<vmem>>) attributes {dimension_semantics = [], scalar_prefetch = 0 : i64, scratch_operands = 0 : i64, tpu.core_type = #tpu.core_type<tc>} {
    %c0 = arith.constant 0 : index
    %c0_0 = arith.constant 0 : index
    %0 = vector.load %arg0[%c0, %c0_0] : memref<256x256xbf16, #tpu.memory_space<vmem>>, vector<256x256xbf16>
    %c0_1 = arith.constant 0 : index
    %c0_2 = arith.constant 0 : index
    %1 = vector.load %arg1[%c0_1, %c0_2] : memref<256x32xbf16, #tpu.memory_space<vmem>>, vector<256x32xbf16>
    %c0_3 = arith.constant 0 : index
    %c0_4 = arith.constant 0 : index
    %2 = vector.load %arg2[%c0_3, %c0_4] : memref<32x64xbf16, #tpu.memory_space<vmem>>, vector<32x64xbf16>
    %c0_5 = arith.constant 0 : index
    %c0_6 = arith.constant 0 : index
    %3 = vector.load %arg3[%c0_5, %c0_6] : memref<1x64xf32, #tpu.memory_space<vmem>>, vector<1x64xf32>
    %cst = arith.constant dense<0.000000e+00> : vector<256x32xf32>
    %4 = tpu.matmul %0, %1, %cst {dimension_numbers = #tpu.dot_dimension_numbers<[1], [0], [0], [1], [0, 0, 1, 1], [], []>} : vector<256x256xbf16>, vector<256x32xbf16>, vector<256x32xf32> -> vector<256x32xf32>
    %5 = arith.truncf %4 : vector<256x32xf32> to vector<256x32xbf16>
    %cst_7 = arith.constant dense<0.000000e+00> : vector<256x64xf32>
    %6 = tpu.matmul %5, %2, %cst_7 {dimension_numbers = #tpu.dot_dimension_numbers<[1], [0], [0], [1], [0, 0, 1, 1], [], []>} : vector<256x32xbf16>, vector<32x64xbf16>, vector<256x64xf32> -> vector<256x64xf32>
    %7 = vector.broadcast %3 : vector<1x64xf32> to vector<256x64xf32>
    %8 = arith.addf %6, %7 : vector<256x64xf32>
    %cst_8 = arith.constant 0.000000e+00 : f32
    %9 = vector.broadcast %cst_8 : f32 to vector<256x64xf32>
    %10 = arith.maximumf %8, %9 : vector<256x64xf32>
    %11 = arith.truncf %10 : vector<256x64xf32> to vector<256x64xbf16>
    %c0_9 = arith.constant 0 : index
    %c0_10 = arith.constant 0 : index
    %12 = vector.load %arg4[%c0_9, %c0_10] : memref<64x64xbf16, #tpu.memory_space<vmem>>, vector<64x64xbf16>
    %c0_11 = arith.constant 0 : index
    %c0_12 = arith.constant 0 : index
    %13 = vector.load %arg5[%c0_11, %c0_12] : memref<1x64xf32, #tpu.memory_space<vmem>>, vector<1x64xf32>
    %cst_13 = arith.constant dense<0.000000e+00> : vector<256x64xf32>
    %14 = tpu.matmul %0, %11, %cst_13 {dimension_numbers = #tpu.dot_dimension_numbers<[1], [0], [0], [1], [0, 0, 1, 1], [], []>} : vector<256x256xbf16>, vector<256x64xbf16>, vector<256x64xf32> -> vector<256x64xf32>
    %15 = arith.truncf %14 : vector<256x64xf32> to vector<256x64xbf16>
    %cst_14 = arith.constant dense<0.000000e+00> : vector<256x64xf32>
    %16 = tpu.matmul %15, %12, %cst_14 {dimension_numbers = #tpu.dot_dimension_numbers<[1], [0], [0], [1], [0, 0, 1, 1], [], []>} : vector<256x64xbf16>, vector<64x64xbf16>, vector<256x64xf32> -> vector<256x64xf32>
    %17 = vector.broadcast %13 : vector<1x64xf32> to vector<256x64xf32>
    %18 = arith.addf %16, %17 : vector<256x64xf32>
    %cst_15 = arith.constant 0.000000e+00 : f32
    %19 = vector.broadcast %cst_15 : f32 to vector<256x64xf32>
    %20 = arith.maximumf %18, %19 : vector<256x64xf32>
    %21 = arith.truncf %20 : vector<256x64xf32> to vector<256x64xbf16>
    %c0_16 = arith.constant 0 : index
    %c0_17 = arith.constant 0 : index
    %22 = vector.load %arg6[%c0_16, %c0_17] : memref<64x128xbf16, #tpu.memory_space<vmem>>, vector<64x128xbf16>
    %c0_18 = arith.constant 0 : index
    %c0_19 = arith.constant 0 : index
    %23 = vector.load %arg7[%c0_18, %c0_19] : memref<1x128xf32, #tpu.memory_space<vmem>>, vector<1x128xf32>
    %cst_20 = arith.constant dense<0.000000e+00> : vector<256x64xf32>
    %24 = tpu.matmul %0, %21, %cst_20 {dimension_numbers = #tpu.dot_dimension_numbers<[1], [0], [0], [1], [0, 0, 1, 1], [], []>} : vector<256x256xbf16>, vector<256x64xbf16>, vector<256x64xf32> -> vector<256x64xf32>
    %25 = arith.truncf %24 : vector<256x64xf32> to vector<256x64xbf16>
    %cst_21 = arith.constant dense<0.000000e+00> : vector<256x128xf32>
    %26 = tpu.matmul %25, %22, %cst_21 {dimension_numbers = #tpu.dot_dimension_numbers<[1], [0], [0], [1], [0, 0, 1, 1], [], []>} : vector<256x64xbf16>, vector<64x128xbf16>, vector<256x128xf32> -> vector<256x128xf32>
    %27 = vector.broadcast %23 : vector<1x128xf32> to vector<256x128xf32>
    %28 = arith.addf %26, %27 : vector<256x128xf32>
    %c0_22 = arith.constant 0 : index
    %c0_23 = arith.constant 0 : index
    %29 = vector.load %arg8[%c0_22, %c0_23] : memref<256x128xf32, #tpu.memory_space<vmem>>, vector<256x128xf32>
    tpu.vector_store %arg8[%c0_22, %c0_23], %28 {strides = array<i32>} : memref<256x128xf32, #tpu.memory_space<vmem>>, vector<256x128xf32>,
    return
  }
}

</mosaic_0001>

<llo_original>
// kernel: tpu_custom_call.1
$region0: #{tpu_custom_call.1}
  #allocation0 [shape = 'u32[]', space=smem, size = 0x4, offset = 0x4, fixed_abs, tag = 'smem constant byte address 0x4 - core index']
  #allocation1 [shape = 'u32[144,128]{1,0:T(1,128)}', space=vmem, size = 0x12000, scoped, tag = 'internal scratch']
  %s0 = inlined_call_operand.hbm [shape: bf16[256,256], index: 0, kind: input, shape index: {}]
  %s1 = inlined_call_operand.vmem [shape: bf16[256,32], index: 1, kind: input, shape index: {}]
  %s2 = inlined_call_operand.vmem [shape: bf16[32,64], index: 2, kind: input, shape index: {}]
  %s3 = inlined_call_operand.vmem [shape: f32[1,64], index: 3, kind: input, shape index: {}]
  %s4 = inlined_call_operand.vmem [shape: bf16[64,64], index: 4, kind: input, shape index: {}]
  %s5 = inlined_call_operand.vmem [shape: f32[1,64], index: 5, kind: input, shape index: {}]
  %s6 = inlined_call_operand.vmem [shape: bf16[64,128], index: 6, kind: input, shape index: {}]
  %s7 = inlined_call_operand.vmem [shape: f32[1,128], index: 7, kind: input, shape index: {}]
  %s8 = inlined_call_operand.hbm [shape: f32[256,128], index: 8, kind: output, shape index: {}]
  %s9 = sld [smem:[#allocation0]]
  $region46: #{tpu_custom_call.1} parent=0
    _
  %s11 = ssub.s32 1, %s9
  %s12 = scalar_select 0, %s11, %s9
  $region1: #{tpu_custom_call.1} parent=0
    #allocation2 [shape = 'u8[131072]{0}', space=vmem, size = 0x20000, scoped, tag = 'input window, operand 0, single buffered']
    #allocation3 [shape = 's32[1]{0}', space=sflag, size = 0x4, scoped, tag = 'scoped memory for tpu_custom_call.1']
    #allocation4 [shape = 's32[1]{0}', space=sflag, size = 0x4, scoped, tag = 'scoped memory for tpu_custom_call.1']
    #allocation5 [shape = 'u8[131072]{0}', space=vmem, size = 0x20000, scoped, tag = 'output window, operand 0, single buffered']
    %13 = vsyncpa [#allocation3], 0
    %14 = vsyncpa [#allocation4], 0
    // Predicated region
    $region2: #{tpu_custom_call.1} parent=1 // pred_check
      _
    $region3: #{tpu_custom_call.1} parent=1 // pred_check_branch
      %16 = sbr.rel (0) target = $region5
    $region4: #{tpu_custom_call.1} parent=1 // pred_region
      %s18 = ssub.s32 4096, 4096
      %19 = vsyncadd [#allocation3], %s18
      %s20 = sshll.u32 [#allocation2], 4
      %s21 = int_to_ptr.vmem [resolvable:$true] %s20
      %26 = dma.hbm_to_vmem [thread:$0]  %s0, 4096, %s21, [#allocation3], 128, 128, 8
    $region5: #{tpu_custom_call.1} parent=1 // pred_fallthru
      _
    // Predicated region
    $region6: #{tpu_custom_call.1} parent=1 // pred_check
      _
    $region7: #{tpu_custom_call.1} parent=1 // pred_check_branch
      %28 = sbr.rel (0) target = $region9
    $region8: #{tpu_custom_call.1} parent=1 // pred_region
      _
    $region9: #{tpu_custom_call.1} parent=1 // pred_fallthru
      _
    // Predicated region
    $region10: #{tpu_custom_call.1} parent=1 // pred_check
      _
    $region11: #{tpu_custom_call.1} parent=1 // pred_check_branch
      %30 = sbr.rel (0) target = $region13
    $region12: #{tpu_custom_call.1} parent=1 // pred_region
      _
    $region13: #{tpu_custom_call.1} parent=1 // pred_fallthru
      _
    // Predicated region
    $region14: #{tpu_custom_call.1} parent=1 // pred_check
      _
    $region15: #{tpu_custom_call.1} parent=1 // pred_check_branch
      %32 = sbr.rel (0) target = $region17
    $region16: #{tpu_custom_call.1} parent=1 // pred_region
      _
    $region17: #{tpu_custom_call.1} parent=1 // pred_fallthru
      _
    // Predicated region
    $region18: #{tpu_custom_call.1} parent=1 // pred_check
      _
    $region19: #{tpu_custom_call.1} parent=1 // pred_check_branch
      %34 = sbr.rel (0) target = $region21
    $region20: #{tpu_custom_call.1} parent=1 // pred_region
      _
    $region21: #{tpu_custom_call.1} parent=1 // pred_fallthru
      _
    // Predicated region
    $region22: #{tpu_custom_call.1} parent=1 // pred_check
      _
    $region23: #{tpu_custom_call.1} parent=1 // pred_check_branch
      %36 = sbr.rel (0) target = $region25
    $region24: #{tpu_custom_call.1} parent=1 // pred_region
      _
    $region25: #{tpu_custom_call.1} parent=1 // pred_fallthru
      _
    // Predicated region
    $region26: #{tpu_custom_call.1} parent=1 // pred_check
      _
    $region27: #{tpu_custom_call.1} parent=1 // pred_check_branch
      %38 = sbr.rel (0) target = $region29
    $region28: #{tpu_custom_call.1} parent=1 // pred_region
      _
    $region29: #{tpu_custom_call.1} parent=1 // pred_fallthru
      _
    // Predicated region
    $region30: #{tpu_custom_call.1} parent=1 // pred_check
      _
    $region31: #{tpu_custom_call.1} parent=1 // pred_check_branch
      %40 = sbr.rel (0) target = $region33
    $region32: #{tpu_custom_call.1} parent=1 // pred_region
      _
    $region33: #{tpu_custom_call.1} parent=1 // pred_fallthru
      _
    // Predicated region
    $region34: #{tpu_custom_call.1} parent=1 // pred_check
      _
    $region35: #{tpu_custom_call.1} parent=1 // pred_check_branch
      %42 = sbr.rel (0) target = $region37
    $region36: #{tpu_custom_call.1} parent=1 // pred_region
      %43 = dma.done [#allocation3], 4096
    $region37: #{tpu_custom_call.1} parent=1 // pred_fallthru
      _
    %v45 = vld [vmem:[#allocation2] sm:$0xff]
    %v46 = vld [vmem:[#allocation2 + $0x8] sm:$0xff]
    %v47 = vld [vmem:[#allocation2 + $0x10] sm:$0xff]
    %v48 = vld [vmem:[#allocation2 + $0x18] sm:$0xff]
    %v49 = vld [vmem:[#allocation2 + $0x20] sm:$0xff]
    %v50 = vld [vmem:[#allocation2 + $0x28] sm:$0xff]
    %v51 = vld [vmem:[#allocation2 + $0x30] sm:$0xff]
    %v52 = vld [vmem:[#allocation2 + $0x38] sm:$0xff]
    %v53 = vld [vmem:[#allocation2 + $0x40] sm:$0xff]
    %v54 = vld [vmem:[#allocation2 + $0x48] sm:$0xff]
    %v55 = vld [vmem:[#allocation2 + $0x50] sm:$0xff]
    %v56 = vld [vmem:[#allocation2 + $0x58] sm:$0xff]
    %v57 = vld [vmem:[#allocation2 + $0x60] sm:$0xff]
    %v58 = vld [vmem:[#allocation2 + $0x68] sm:$0xff]
    %v59 = vld [vmem:[#allocation2 + $0x70] sm:$0xff]
    %v60 = vld [vmem:[#allocation2 + $0x78] sm:$0xff]
    %v61 = vld [vmem:[#allocation2 + $0x80] sm:$0xff]
    %v62 = vld [vmem:[#allocation2 + $0x88] sm:$0xff]
    %v63 = vld [vmem:[#allocation2 + $0x90] sm:$0xff]
    %v64 = vld [vmem:[#allocation2 + $0x98] sm:$0xff]
    %v65 = vld [vmem:[#allocation2 + $0xa0] sm:$0xff]
    %v66 = vld [vmem:[#allocation2 + $0xa8] sm:$0xff]
    %v67 = vld [vmem:[#allocation2 + $0xb0] sm:$0xff]
    %v68 = vld [vmem:[#allocation2 + $0xb8] sm:$0xff]
    %v69 = vld [vmem:[#allocation2 + $0xc0] sm:$0xff]
    %v70 = vld [vmem:[#allocation2 + $0xc8] sm:$0xff]
    %v71 = vld [vmem:[#allocation2 + $0xd0] sm:$0xff]
    %v72 = vld [vmem:[#allocation2 + $0xd8] sm:$0xff]
    %v73 = vld [vmem:[#allocation2 + $0xe0] sm:$0xff]
    %v74 = vld [vmem:[#allocation2 + $0xe8] sm:$0xff]
    %v75 = vld [vmem:[#allocation2 + $0xf0] sm:$0xff]
    %v76 = vld [vmem:[#allocation2 + $0xf8] sm:$0xff]
    %v77 = vld [vmem:[%s1] sm:$0xf]
    %v78 = vld [vmem:[%s1 + $0x4] sm:$0xf]
    %v79 = vld [vmem:[%s1 + $0x8] sm:$0xf]
    %v80 = vld [vmem:[%s1 + $0xc] sm:$0xf]
    %v81 = vld [vmem:[%s1 + $0x10] sm:$0xf]
    %v82 = vld [vmem:[%s1 + $0x14] sm:$0xf]
    %v83 = vld [vmem:[%s1 + $0x18] sm:$0xf]
    %v84 = vld [vmem:[%s1 + $0x1c] sm:$0xf]
    %v85 = vld [vmem:[%s1 + $0x20] sm:$0xf]
    %v86 = vld [vmem:[%s1 + $0x24] sm:$0xf]
    %v87 = vld [vmem:[%s1 + $0x28] sm:$0xf]
    %v88 = vld [vmem:[%s1 + $0x2c] sm:$0xf]
    %v89 = vld [vmem:[%s1 + $0x30] sm:$0xf]
    %v90 = vld [vmem:[%s1 + $0x34] sm:$0xf]
    %v91 = vld [vmem:[%s1 + $0x38] sm:$0xf]
    %v92 = vld [vmem:[%s1 + $0x3c] sm:$0xf]
    %v93 = vld [vmem:[%s1 + $0x40] sm:$0xf]
    %v94 = vld [vmem:[%s1 + $0x44] sm:$0xf]
    %v95 = vld [vmem:[%s1 + $0x48] sm:$0xf]
    %v96 = vld [vmem:[%s1 + $0x4c] sm:$0xf]
    %v97 = vld [vmem:[%s1 + $0x50] sm:$0xf]
    %v98 = vld [vmem:[%s1 + $0x54] sm:$0xf]
    %v99 = vld [vmem:[%s1 + $0x58] sm:$0xf]
    %v100 = vld [vmem:[%s1 + $0x5c] sm:$0xf]
    %v101 = vld [vmem:[%s1 + $0x60] sm:$0xf]
    %v102 = vld [vmem:[%s1 + $0x64] sm:$0xf]
    %v103 = vld [vmem:[%s1 + $0x68] sm:$0xf]
    %v104 = vld [vmem:[%s1 + $0x6c] sm:$0xf]
    %v105 = vld [vmem:[%s1 + $0x70] sm:$0xf]
    %v106 = vld [vmem:[%s1 + $0x74] sm:$0xf]
    %v107 = vld [vmem:[%s1 + $0x78] sm:$0xf]
    %v108 = vld [vmem:[%s1 + $0x7c] sm:$0xf]
    %v109 = vld [vmem:[%s2] sm:$0xf]
    %v110 = vld [vmem:[%s2 + $0x4] sm:$0xf]
    %v111 = vld [vmem:[%s2 + $0x8] sm:$0xf]
    %v112 = vld [vmem:[%s2 + $0xc] sm:$0xf]
    %v113 = vld [vmem:[%s3] sm:$0x1]
    %v146 = vunpack.c.l.b16 %v45
    %v147 = vunpack.c.h.b16 %v45
    %v148 = vunpack.c.l.b16 %v46
    %v149 = vunpack.c.h.b16 %v46
    %v150 = vunpack.c.l.b16 %v47
    %v151 = vunpack.c.h.b16 %v47
    %v152 = vunpack.c.l.b16 %v48
    %v153 = vunpack.c.h.b16 %v48
    %v154 = vunpack.c.l.b16 %v49
    %v155 = vunpack.c.h.b16 %v49
    %v156 = vunpack.c.l.b16 %v50
    %v157 = vunpack.c.h.b16 %v50
    %v158 = vunpack.c.l.b16 %v51
    %v159 = vunpack.c.h.b16 %v51
    %v160 = vunpack.c.l.b16 %v52
    %v161 = vunpack.c.h.b16 %v52
    %v162 = vunpack.c.l.b16 %v53
    %v163 = vunpack.c.h.b16 %v53
    %v164 = vunpack.c.l.b16 %v54
    %v165 = vunpack.c.h.b16 %v54
    %v166 = vunpack.c.l.b16 %v55
    %v167 = vunpack.c.h.b16 %v55
    %v168 = vunpack.c.l.b16 %v56
    %v169 = vunpack.c.h.b16 %v56
    %v170 = vunpack.c.l.b16 %v57
    %v171 = vunpack.c.h.b16 %v57
    %v172 = vunpack.c.l.b16 %v58
    %v173 = vunpack.c.h.b16 %v58
    %v174 = vunpack.c.l.b16 %v59
    %v175 = vunpack.c.h.b16 %v59
    %v176 = vunpack.c.l.b16 %v60
    %v177 = vunpack.c.h.b16 %v60
    %v178 = vunpack.c.l.b16 %v61
    %v179 = vunpack.c.h.b16 %v61
    %v180 = vunpack.c.l.b16 %v62
    %v181 = vunpack.c.h.b16 %v62
    %v182 = vunpack.c.l.b16 %v63
    %v183 = vunpack.c.h.b16 %v63
    %v184 = vunpack.c.l.b16 %v64
    %v185 = vunpack.c.h.b16 %v64
    %v186 = vunpack.c.l.b16 %v65
    %v187 = vunpack.c.h.b16 %v65
    %v188 = vunpack.c.l.b16 %v66
    %v189 = vunpack.c.h.b16 %v66
    %v190 = vunpack.c.l.b16 %v67
    %v191 = vunpack.c.h.b16 %v67
    %v192 = vunpack.c.l.b16 %v68
    %v193 = vunpack.c.h.b16 %v68
    %v194 = vunpack.c.l.b16 %v69
    %v195 = vunpack.c.h.b16 %v69
    %v196 = vunpack.c.l.b16 %v70
    %v197 = vunpack.c.h.b16 %v70
    %v198 = vunpack.c.l.b16 %v71
    %v199 = vunpack.c.h.b16 %v71
    %v200 = vunpack.c.l.b16 %v72
    %v201 = vunpack.c.h.b16 %v72
    %v202 = vunpack.c.l.b16 %v73
    %v203 = vunpack.c.h.b16 %v73
    %v204 = vunpack.c.l.b16 %v74
    %v205 = vunpack.c.h.b16 %v74
    %v206 = vunpack.c.l.b16 %v75
    %v207 = vunpack.c.h.b16 %v75
    %v208 = vunpack.c.l.b16 %v76
    %v209 = vunpack.c.h.b16 %v76
    %v210 = vpack.c.b16 %v148, %v146
    %v211 = vpack.c.b16 %v149, %v147
    %v212 = vpack.c.b16 %v152, %v150
    %v213 = vpack.c.b16 %v153, %v151
    %v214 = vpack.c.b16 %v156, %v154
    %v215 = vpack.c.b16 %v157, %v155
    %v216 = vpack.c.b16 %v160, %v158
    %v217 = vpack.c.b16 %v161, %v159
    %v218 = vpack.c.b16 %v164, %v162
    %v219 = vpack.c.b16 %v165, %v163
    %v220 = vpack.c.b16 %v168, %v166
    %v221 = vpack.c.b16 %v169, %v167
    %v222 = vpack.c.b16 %v172, %v170
    %v223 = vpack.c.b16 %v173, %v171
    %v224 = vpack.c.b16 %v176, %v174
    %v225 = vpack.c.b16 %v177, %v175
    %v226 = vpack.c.b16 %v180, %v178
    %v227 = vpack.c.b16 %v181, %v179
    %v228 = vpack.c.b16 %v184, %v182
    %v229 = vpack.c.b16 %v185, %v183
    %v230 = vpack.c.b16 %v188, %v186
    %v231 = vpack.c.b16 %v189, %v187
    %v232 = vpack.c.b16 %v192, %v190
    %v233 = vpack.c.b16 %v193, %v191
    %v234 = vpack.c.b16 %v196, %v194
    %v235 = vpack.c.b16 %v197, %v195
    %v236 = vpack.c.b16 %v200, %v198
    %v237 = vpack.c.b16 %v201, %v199
    %v238 = vpack.c.b16 %v204, %v202
    %v239 = vpack.c.b16 %v205, %v203
    %v240 = vpack.c.b16 %v208, %v206
    %v241 = vpack.c.b16 %v209, %v207
    %v306 = vunpack.c.l.b16 %v77
    %v307 = vunpack.c.l.b16 %v78
    %v308 = vunpack.c.l.b16 %v79
    %v309 = vunpack.c.l.b16 %v80
    %v310 = vunpack.c.l.b16 %v81
    %v311 = vunpack.c.l.b16 %v82
    %v312 = vunpack.c.l.b16 %v83
    %v313 = vunpack.c.l.b16 %v84
    %v314 = vunpack.c.l.b16 %v85
    %v315 = vunpack.c.l.b16 %v86
    %v316 = vunpack.c.l.b16 %v87
    %v317 = vunpack.c.l.b16 %v88
    %v318 = vunpack.c.l.b16 %v89
    %v319 = vunpack.c.l.b16 %v90
    %v320 = vunpack.c.l.b16 %v91
    %v321 = vunpack.c.l.b16 %v92
    %v322 = vunpack.c.l.b16 %v93
    %v323 = vunpack.c.l.b16 %v94
    %v324 = vunpack.c.l.b16 %v95
    %v325 = vunpack.c.l.b16 %v96
    %v326 = vunpack.c.l.b16 %v97
    %v327 = vunpack.c.l.b16 %v98
    %v328 = vunpack.c.l.b16 %v99
    %v329 = vunpack.c.l.b16 %v100
    %v330 = vunpack.c.l.b16 %v101
    %v331 = vunpack.c.l.b16 %v102
    %v332 = vunpack.c.l.b16 %v103
    %v333 = vunpack.c.l.b16 %v104
    %v334 = vunpack.c.l.b16 %v105
    %v335 = vunpack.c.l.b16 %v106
    %v336 = vunpack.c.l.b16 %v107
    %v337 = vunpack.c.l.b16 %v108
    %v338 = vpack.c.b16 %v307, %v306
    %v339 = vpack.c.b16 %v309, %v308
    %v340 = vpack.c.b16 %v311, %v310
    %v341 = vpack.c.b16 %v313, %v312
    %v342 = vpack.c.b16 %v315, %v314
    %v343 = vpack.c.b16 %v317, %v316
    %v344 = vpack.c.b16 %v319, %v318
    %v345 = vpack.c.b16 %v321, %v320
    %v346 = vpack.c.b16 %v323, %v322
    %v347 = vpack.c.b16 %v325, %v324
    %v348 = vpack.c.b16 %v327, %v326
    %v349 = vpack.c.b16 %v329, %v328
    %v350 = vpack.c.b16 %v331, %v330
    %v351 = vpack.c.b16 %v333, %v332
    %v352 = vpack.c.b16 %v335, %v334
    %v353 = vpack.c.b16 %v337, %v336
    %370 = vmatprep.subr.bf16.mxu0 0
    %371 = vmatpush1.bf16.msra.mxu0 %v345
    %372 = vmatprep.subr.bf16.mxu0 0
    %373 = vmatpush1.bf16.msra.mxu0 %v344
    %374 = vmatprep.subr.bf16.mxu0 0
    %375 = vmatpush1.bf16.msra.mxu0 %v343
    %376 = vmatprep.subr.bf16.mxu0 0
    %377 = vmatpush1.bf16.msra.mxu0 %v342
    %378 = vmatprep.subr.bf16.mxu0 0
    %379 = vmatpush1.bf16.msra.mxu0 %v341
    %380 = vmatprep.subr.bf16.mxu0 0
    %381 = vmatpush1.bf16.msra.mxu0 %v340
    %382 = vmatprep.subr.bf16.mxu0 0
    %383 = vmatpush1.bf16.msra.mxu0 %v339
    %384 = vmatprep.subr.bf16.mxu0 0
    %385 = vmatpush1.bf16.msra.mxu0 %v338
    %386 = vmatprep.subr.bf16.mxu0 0
    %387 = vmatpush2.bf16.msra.mxu0 %v353
    %388 = vmatprep.subr.bf16.mxu0 0
    %389 = vmatpush2.bf16.msra.mxu0 %v352
    %390 = vmatprep.subr.bf16.mxu0 0
    %391 = vmatpush2.bf16.msra.mxu0 %v351
    %392 = vmatprep.subr.bf16.mxu0 0
    %393 = vmatpush2.bf16.msra.mxu0 %v350
    %394 = vmatprep.subr.bf16.mxu0 0
    %395 = vmatpush2.bf16.msra.mxu0 %v349
    %396 = vmatprep.subr.bf16.mxu0 0
    %397 = vmatpush2.bf16.msra.mxu0 %v348
    %398 = vmatprep.subr.bf16.mxu0 0
    %399 = vmatpush2.bf16.msra.mxu0 %v347
    %400 = vmatprep.subr.bf16.mxu0 0
    %401 = vmatpush2.bf16.msra.mxu0 %v346
    %402 = vmatprep.mubr.bf16.mxu0 %v211
    %403 = vmatmul.mubr.bf16.gmra.mxu0 %v210
    %v404 = vpop.f32.mrf.mxu0
    %v405 = vadd.f32 0.0, %v404
    %v406 = vpop.f32.mrf.mxu0
    %v407 = vpop.f32.mrf.mxu0
    %v408 = vadd.f32 0.0, %v407
    %v409 = vpop.f32.mrf.mxu0
    %410 = vmatprep.mubr.bf16.mxu0 %v213
    %411 = vmatmul.mubr.bf16.gmra.mxu0 %v212
    %v412 = vpop.f32.mrf.mxu0
    %v413 = vadd.f32 0.0, %v412
    %v414 = vpop.f32.mrf.mxu0
    %v415 = vpop.f32.mrf.mxu0
    %v416 = vadd.f32 0.0, %v415
    %v417 = vpop.f32.mrf.mxu0
    %418 = vmatprep.mubr.bf16.mxu0 %v215
    %419 = vmatmul.mubr.bf16.gmra.mxu0 %v214
    %v420 = vpop.f32.mrf.mxu0
    %v421 = vadd.f32 0.0, %v420
    %v422 = vpop.f32.mrf.mxu0
    %v423 = vpop.f32.mrf.mxu0
    %v424 = vadd.f32 0.0, %v423
    %v425 = vpop.f32.mrf.mxu0
    %426 = vmatprep.mubr.bf16.mxu0 %v217
    %427 = vmatmul.mubr.bf16.gmra.mxu0 %v216
    %v428 = vpop.f32.mrf.mxu0
    %v429 = vadd.f32 0.0, %v428
    %v430 = vpop.f32.mrf.mxu0
    %v431 = vpop.f32.mrf.mxu0
    %v432 = vadd.f32 0.0, %v431
    %v433 = vpop.f32.mrf.mxu0
    %434 = vmatprep.mubr.bf16.mxu0 %v219
    %435 = vmatmul.mubr.bf16.gmra.mxu0 %v218
    %v436 = vpop.f32.mrf.mxu0
    %v437 = vadd.f32 0.0, %v436
    %v438 = vpop.f32.mrf.mxu0
    %v439 = vpop.f32.mrf.mxu0
    %v440 = vadd.f32 0.0, %v439
    %v441 = vpop.f32.mrf.mxu0
    %442 = vmatprep.mubr.bf16.mxu0 %v221
    %443 = vmatmul.mubr.bf16.gmra.mxu0 %v220
    %v444 = vpop.f32.mrf.mxu0
    %v445 = vadd.f32 0.0, %v444
    %v446 = vpop.f32.mrf.mxu0
    %v447 = vpop.f32.mrf.mxu0
    %v448 = vadd.f32 0.0, %v447
    %v449 = vpop.f32.mrf.mxu0
    %450 = vmatprep.mubr.bf16.mxu0 %v223
    %451 = vmatmul.mubr.bf16.gmra.mxu0 %v222
    %v452 = vpop.f32.mrf.mxu0
    %v453 = vadd.f32 0.0, %v452
    %v454 = vpop.f32.mrf.mxu0
    %v455 = vpop.f32.mrf.mxu0
    %v456 = vadd.f32 0.0, %v455
    %v457 = vpop.f32.mrf.mxu0
    %458 = vmatprep.mubr.bf16.mxu0 %v225
    %459 = vmatmul.mubr.bf16.gmra.mxu0 %v224
    %v460 = vpop.f32.mrf.mxu0
    %v461 = vadd.f32 0.0, %v460
    %v462 = vpop.f32.mrf.mxu0
    %v463 = vpop.f32.mrf.mxu0
    %v464 = vadd.f32 0.0, %v463
    %v465 = vpop.f32.mrf.mxu0
    %466 = vmatprep.mubr.bf16.mxu0 %v227
    %467 = vmatmul.mubr.bf16.gmra.mxu0 %v226
    %v468 = vpop.f32.mrf.mxu0
    %v469 = vadd.f32 0.0, %v468
    %v470 = vpop.f32.mrf.mxu0
    %v471 = vpop.f32.mrf.mxu0
    %v472 = vadd.f32 0.0, %v471
    %v473 = vpop.f32.mrf.mxu0
    %474 = vmatprep.mubr.bf16.mxu0 %v229
    %475 = vmatmul.mubr.bf16.gmra.mxu0 %v228
    %v476 = vpop.f32.mrf.mxu0
    %v477 = vadd.f32 0.0, %v476
    %v478 = vpop.f32.mrf.mxu0
    %v479 = vpop.f32.mrf.mxu0
    %v480 = vadd.f32 0.0, %v479
    %v481 = vpop.f32.mrf.mxu0
    %482 = vmatprep.mubr.bf16.mxu0 %v231
    %483 = vmatmul.mubr.bf16.gmra.mxu0 %v230
    %v484 = vpop.f32.mrf.mxu0
    %v485 = vadd.f32 0.0, %v484
    %v486 = vpop.f32.mrf.mxu0
    %v487 = vpop.f32.mrf.mxu0
    %v488 = vadd.f32 0.0, %v487
    %v489 = vpop.f32.mrf.mxu0
    %490 = vmatprep.mubr.bf16.mxu0 %v233
    %491 = vmatmul.mubr.bf16.gmra.mxu0 %v232
    %v492 = vpop.f32.mrf.mxu0
    %v493 = vadd.f32 0.0, %v492
    %v494 = vpop.f32.mrf.mxu0
    %v495 = vpop.f32.mrf.mxu0
    %v496 = vadd.f32 0.0, %v495
    %v497 = vpop.f32.mrf.mxu0
    %498 = vmatprep.mubr.bf16.mxu0 %v235
    %499 = vmatmul.mubr.bf16.gmra.mxu0 %v234
    %v500 = vpop.f32.mrf.mxu0
    %v501 = vadd.f32 0.0, %v500
    %v502 = vpop.f32.mrf.mxu0
    %v503 = vpop.f32.mrf.mxu0
    %v504 = vadd.f32 0.0, %v503
    %v505 = vpop.f32.mrf.mxu0
    %506 = vmatprep.mubr.bf16.mxu0 %v237
    %507 = vmatmul.mubr.bf16.gmra.mxu0 %v236
    %v508 = vpop.f32.mrf.mxu0
    %v509 = vadd.f32 0.0, %v508
    %v510 = vpop.f32.mrf.mxu0
    %v511 = vpop.f32.mrf.mxu0
    %v512 = vadd.f32 0.0, %v511
    %v513 = vpop.f32.mrf.mxu0
    %514 = vmatprep.mubr.bf16.mxu0 %v239
    %515 = vmatmul.mubr.bf16.gmra.mxu0 %v238
    %v516 = vpop.f32.mrf.mxu0
    %v517 = vadd.f32 0.0, %v516
    %v518 = vpop.f32.mrf.mxu0
    %v519 = vpop.f32.mrf.mxu0
    %v520 = vadd.f32 0.0, %v519
    %v521 = vpop.f32.mrf.mxu0
    %522 = vmatprep.mubr.bf16.mxu0 %v241
    %523 = vmatmul.mubr.bf16.gmra.mxu0 %v240
    %v524 = vpop.f32.mrf.mxu0
    %v525 = vadd.f32 0.0, %v524
    %v526 = vpop.f32.mrf.mxu0
    %v527 = vpop.f32.mrf.mxu0
    %v528 = vadd.f32 0.0, %v527
    %v529 = vpop.f32.mrf.mxu0
    %530 = vdwg.mxu0
    %v531 = vpack.c.bf16 %v408, %v405
    %v532 = vpack.c.bf16 %v416, %v413
    %v533 = vpack.c.bf16 %v424, %v421
    %v534 = vpack.c.bf16 %v432, %v429
    %v535 = vpack.c.bf16 %v440, %v437
    %v536 = vpack.c.bf16 %v448, %v445
    %v537 = vpack.c.bf16 %v456, %v453
    %v538 = vpack.c.bf16 %v464, %v461
    %v539 = vpack.c.bf16 %v472, %v469
    %v540 = vpack.c.bf16 %v480, %v477
    %v541 = vpack.c.bf16 %v488, %v485
    %v542 = vpack.c.bf16 %v496, %v493
    %v543 = vpack.c.bf16 %v504, %v501
    %v544 = vpack.c.bf16 %v512, %v509
    %v545 = vpack.c.bf16 %v520, %v517
    %v546 = vpack.c.bf16 %v528, %v525
    %v548 = vlaneseq
    %v549 = vshrl.u32 %v548, 7
    %v550 = vsub.s32 0, %v549
    %v551 = vrot.slane %v113, %v550
    %v557 = vunpack.c.l.b16 %v109
    %v558 = vunpack.c.l.b16 %v110
    %v559 = vunpack.c.l.b16 %v111
    %v560 = vunpack.c.l.b16 %v112
    %v561 = vpack.c.b16 %v558, %v557
    %v562 = vpack.c.b16 %v560, %v559
    %vm565 = vcmask 261120
    %v567 = vsel %vm565, %v531, 0
    %v570 = vsel %vm565, %v532, 0
    %v573 = vsel %vm565, %v533, 0
    %v576 = vsel %vm565, %v534, 0
    %v579 = vsel %vm565, %v535, 0
    %v582 = vsel %vm565, %v536, 0
    %v585 = vsel %vm565, %v537, 0
    %v588 = vsel %vm565, %v538, 0
    %v591 = vsel %vm565, %v539, 0
    %v594 = vsel %vm565, %v540, 0
    %v597 = vsel %vm565, %v541, 0
    %v600 = vsel %vm565, %v542, 0
    %v603 = vsel %vm565, %v543, 0
    %v606 = vsel %vm565, %v544, 0
    %v609 = vsel %vm565, %v545, 0
    %v612 = vsel %vm565, %v546, 0
    %614 = vmatprep.subr.bf16.mxu0 0
    %615 = vmatpush1.bf16.msra.mxu0 0
    %616 = vmatprep.subr.bf16.mxu0 0
    %617 = vmatpush1.bf16.msra.mxu0 0
    %618 = vmatprep.subr.bf16.mxu0 0
    %619 = vmatpush1.bf16.msra.mxu0 0
    %620 = vmatprep.subr.bf16.mxu0 0
    %621 = vmatpush1.bf16.msra.mxu0 0
    %622 = vmatprep.subr.bf16.mxu0 0
    %623 = vmatpush1.bf16.msra.mxu0 0
    %624 = vmatprep.subr.bf16.mxu0 0
    %625 = vmatpush1.bf16.msra.mxu0 0
    %626 = vmatprep.subr.bf16.mxu0 0
    %627 = vmatpush1.bf16.msra.mxu0 %v562
    %628 = vmatprep.subr.bf16.mxu0 0
    %629 = vmatpush1.bf16.msra.mxu0 %v561
    %630 = vmatprep.subr.bf16.mxu0 0
    %631 = vmatpush2.bf16.msra.mxu0 0
    %632 = vmatprep.subr.bf16.mxu0 0
    %633 = vmatpush2.bf16.msra.mxu0 0
    %634 = vmatprep.subr.bf16.mxu0 0
    %635 = vmatpush2.bf16.msra.mxu0 0
    %636 = vmatprep.subr.bf16.mxu0 0
    %637 = vmatpush2.bf16.msra.mxu0 0
    %638 = vmatprep.subr.bf16.mxu0 0
    %639 = vmatpush2.bf16.msra.mxu0 0
    %640 = vmatprep.subr.bf16.mxu0 0
    %641 = vmatpush2.bf16.msra.mxu0 0
    %642 = vmatprep.subr.bf16.mxu0 0
    %643 = vmatpush2.bf16.msra.mxu0 0
    %644 = vmatprep.subr.bf16.mxu0 0
    %645 = vmatpush2.bf16.msra.mxu0 0
    %646 = vmatprep.mubr.bf16.mxu0 0
    %647 = vmatmul.mubr.bf16.gmra.mxu0 %v567
    %v648 = vpop.f32.mrf.mxu0
    %v649 = vadd.f32 %v551, %v648
    %v650 = vpop.f32.mrf.mxu0
    %v651 = vpop.f32.mrf.mxu0
    %v652 = vadd.f32 %v551, %v651
    %v653 = vpop.f32.mrf.mxu0
    %654 = vmatprep.mubr.bf16.mxu0 0
    %655 = vmatmul.mubr.bf16.gmra.mxu0 %v570
    %v656 = vpop.f32.mrf.mxu0
    %v657 = vadd.f32 %v551, %v656
    %v658 = vpop.f32.mrf.mxu0
    %v659 = vpop.f32.mrf.mxu0
    %v660 = vadd.f32 %v551, %v659
    %v661 = vpop.f32.mrf.mxu0
    %662 = vmatprep.mubr.bf16.mxu0 0
    %663 = vmatmul.mubr.bf16.gmra.mxu0 %v573
    %v664 = vpop.f32.mrf.mxu0
    %v665 = vadd.f32 %v551, %v664
    %v666 = vpop.f32.mrf.mxu0
    %v667 = vpop.f32.mrf.mxu0
    %v668 = vadd.f32 %v551, %v667
    %v669 = vpop.f32.mrf.mxu0
    %670 = vmatprep.mubr.bf16.mxu0 0
    %671 = vmatmul.mubr.bf16.gmra.mxu0 %v576
    %v672 = vpop.f32.mrf.mxu0
    %v673 = vadd.f32 %v551, %v672
    %v674 = vpop.f32.mrf.mxu0
    %v675 = vpop.f32.mrf.mxu0
    %v676 = vadd.f32 %v551, %v675
    %v677 = vpop.f32.mrf.mxu0
    %678 = vmatprep.mubr.bf16.mxu0 0
    %679 = vmatmul.mubr.bf16.gmra.mxu0 %v579
    %v680 = vpop.f32.mrf.mxu0
    %v681 = vadd.f32 %v551, %v680
    %v682 = vpop.f32.mrf.mxu0
    %v683 = vpop.f32.mrf.mxu0
    %v684 = vadd.f32 %v551, %v683
    %v685 = vpop.f32.mrf.mxu0
    %686 = vmatprep.mubr.bf16.mxu0 0
    %687 = vmatmul.mubr.bf16.gmra.mxu0 %v582
    %v688 = vpop.f32.mrf.mxu0
    %v689 = vadd.f32 %v551, %v688
    %v690 = vpop.f32.mrf.mxu0
    %v691 = vpop.f32.mrf.mxu0
    %v692 = vadd.f32 %v551, %v691
    %v693 = vpop.f32.mrf.mxu0
    %694 = vmatprep.mubr.bf16.mxu0 0
    %695 = vmatmul.mubr.bf16.gmra.mxu0 %v585
    %v696 = vpop.f32.mrf.mxu0
    %v697 = vadd.f32 %v551, %v696
    %v698 = vpop.f32.mrf.mxu0
    %v699 = vpop.f32.mrf.mxu0
    %v700 = vadd.f32 %v551, %v699
    %v701 = vpop.f32.mrf.mxu0
    %702 = vmatprep.mubr.bf16.mxu0 0
    %703 = vmatmul.mubr.bf16.gmra.mxu0 %v588
    %v704 = vpop.f32.mrf.mxu0
    %v705 = vadd.f32 %v551, %v704
    %v706 = vpop.f32.mrf.mxu0
    %v707 = vpop.f32.mrf.mxu0
    %v708 = vadd.f32 %v551, %v707
    %v709 = vpop.f32.mrf.mxu0
    %710 = vmatprep.mubr.bf16.mxu0 0
    %711 = vmatmul.mubr.bf16.gmra.mxu0 %v591
    %v712 = vpop.f32.mrf.mxu0
    %v713 = vadd.f32 %v551, %v712
    %v714 = vpop.f32.mrf.mxu0
    %v715 = vpop.f32.mrf.mxu0
    %v716 = vadd.f32 %v551, %v715
    %v717 = vpop.f32.mrf.mxu0
    %718 = vmatprep.mubr.bf16.mxu0 0
    %719 = vmatmul.mubr.bf16.gmra.mxu0 %v594
    %v720 = vpop.f32.mrf.mxu0
    %v721 = vadd.f32 %v551, %v720
    %v722 = vpop.f32.mrf.mxu0
    %v723 = vpop.f32.mrf.mxu0
    %v724 = vadd.f32 %v551, %v723
    %v725 = vpop.f32.mrf.mxu0
    %726 = vmatprep.mubr.bf16.mxu0 0
    %727 = vmatmul.mubr.bf16.gmra.mxu0 %v597
    %v728 = vpop.f32.mrf.mxu0
    %v729 = vadd.f32 %v551, %v728
    %v730 = vpop.f32.mrf.mxu0
    %v731 = vpop.f32.mrf.mxu0
    %v732 = vadd.f32 %v551, %v731
    %v733 = vpop.f32.mrf.mxu0
    %734 = vmatprep.mubr.bf16.mxu0 0
    %735 = vmatmul.mubr.bf16.gmra.mxu0 %v600
    %v736 = vpop.f32.mrf.mxu0
    %v737 = vadd.f32 %v551, %v736
    %v738 = vpop.f32.mrf.mxu0
    %v739 = vpop.f32.mrf.mxu0
    %v740 = vadd.f32 %v551, %v739
    %v741 = vpop.f32.mrf.mxu0
    %742 = vmatprep.mubr.bf16.mxu0 0
    %743 = vmatmul.mubr.bf16.gmra.mxu0 %v603
    %v744 = vpop.f32.mrf.mxu0
    %v745 = vadd.f32 %v551, %v744
    %v746 = vpop.f32.mrf.mxu0
    %v747 = vpop.f32.mrf.mxu0
    %v748 = vadd.f32 %v551, %v747
    %v749 = vpop.f32.mrf.mxu0
    %750 = vmatprep.mubr.bf16.mxu0 0
    %751 = vmatmul.mubr.bf16.gmra.mxu0 %v606
    %v752 = vpop.f32.mrf.mxu0
    %v753 = vadd.f32 %v551, %v752
    %v754 = vpop.f32.mrf.mxu0
    %v755 = vpop.f32.mrf.mxu0
    %v756 = vadd.f32 %v551, %v755
    %v757 = vpop.f32.mrf.mxu0
    %758 = vmatprep.mubr.bf16.mxu0 0
    %759 = vmatmul.mubr.bf16.gmra.mxu0 %v609
    %v760 = vpop.f32.mrf.mxu0
    %v761 = vadd.f32 %v551, %v760
    %v762 = vpop.f32.mrf.mxu0
    %v763 = vpop.f32.mrf.mxu0
    %v764 = vadd.f32 %v551, %v763
    %v765 = vpop.f32.mrf.mxu0
    %766 = vmatprep.mubr.bf16.mxu0 0
    %767 = vmatmul.mubr.bf16.gmra.mxu0 %v612
    %v768 = vpop.f32.mrf.mxu0
    %v769 = vadd.f32 %v551, %v768
    %v770 = vpop.f32.mrf.mxu0
    %v771 = vpop.f32.mrf.mxu0
    %v772 = vadd.f32 %v551, %v771
    %v773 = vpop.f32.mrf.mxu0
    %774 = vdwg.mxu0
    %v775 = vmax.f32 %v649, 0.0
    %v776 = vmax.f32 %v652, 0.0
    %v777 = vmax.f32 %v657, 0.0
    %v778 = vmax.f32 %v660, 0.0
    %v779 = vmax.f32 %v665, 0.0
    %v780 = vmax.f32 %v668, 0.0
    %v781 = vmax.f32 %v673, 0.0
    %v782 = vmax.f32 %v676, 0.0
    %v783 = vmax.f32 %v681, 0.0
    %v784 = vmax.f32 %v684, 0.0
    %v785 = vmax.f32 %v689, 0.0
    %v786 = vmax.f32 %v692, 0.0
    %v787 = vmax.f32 %v697, 0.0
    %v788 = vmax.f32 %v700, 0.0
    %v789 = vmax.f32 %v705, 0.0
    %v790 = vmax.f32 %v708, 0.0
    %v791 = vmax.f32 %v713, 0.0
    %v792 = vmax.f32 %v716, 0.0
    %v793 = vmax.f32 %v721, 0.0
    %v794 = vmax.f32 %v724, 0.0
    %v795 = vmax.f32 %v729, 0.0
    %v796 = vmax.f32 %v732, 0.0
    %v797 = vmax.f32 %v737, 0.0
    %v798 = vmax.f32 %v740, 0.0
    %v799 = vmax.f32 %v745, 0.0
    %v800 = vmax.f32 %v748, 0.0
    %v801 = vmax.f32 %v753, 0.0
    %v802 = vmax.f32 %v756, 0.0
    %v803 = vmax.f32 %v761, 0.0
    %v804 = vmax.f32 %v764, 0.0
    %v805 = vmax.f32 %v769, 0.0
    %v806 = vmax.f32 %v772, 0.0
    %v807 = vpack.c.bf16 %v776, %v775
    %v808 = vpack.c.bf16 %v778, %v777
    %v809 = vpack.c.bf16 %v780, %v779
    %v810 = vpack.c.bf16 %v782, %v781
    %v811 = vpack.c.bf16 %v784, %v783
    %v812 = vpack.c.bf16 %v786, %v785
    %v813 = vpack.c.bf16 %v788, %v787
    %v814 = vpack.c.bf16 %v790, %v789
    %v815 = vpack.c.bf16 %v792, %v791
    %v816 = vpack.c.bf16 %v794, %v793
    %v817 = vpack.c.bf16 %v796, %v795
    %v818 = vpack.c.bf16 %v798, %v797
    %v819 = vpack.c.bf16 %v800, %v799
    %v820 = vpack.c.bf16 %v802, %v801
    %v821 = vpack.c.bf16 %v804, %v803
    %v822 = vpack.c.bf16 %v806, %v805
    %v823 = vld [vmem:[%s4] sm:$0xf]
    %v824 = vld [vmem:[%s4 + $0x4] sm:$0xf]
    %v825 = vld [vmem:[%s4 + $0x8] sm:$0xf]
    %v826 = vld [vmem:[%s4 + $0xc] sm:$0xf]
    %v827 = vld [vmem:[%s4 + $0x10] sm:$0xf]
    %v828 = vld [vmem:[%s4 + $0x14] sm:$0xf]
    %v829 = vld [vmem:[%s4 + $0x18] sm:$0xf]
    %v830 = vld [vmem:[%s4 + $0x1c] sm:$0xf]
    %v831 = vld [vmem:[%s5] sm:$0x1]
    %832 = vmatprep.subr.bf16.mxu0 0
    %833 = vmatpush1.bf16.msra.mxu0 %v814
    %834 = vmatprep.subr.bf16.mxu0 0
    %835 = vmatpush1.bf16.msra.mxu0 %v813
    %836 = vmatprep.subr.bf16.mxu0 0
    %837 = vmatpush1.bf16.msra.mxu0 %v812
    %838 = vmatprep.subr.bf16.mxu0 0
    %839 = vmatpush1.bf16.msra.mxu0 %v811
    %840 = vmatprep.subr.bf16.mxu0 0
    %841 = vmatpush1.bf16.msra.mxu0 %v810
    %842 = vmatprep.subr.bf16.mxu0 0
    %843 = vmatpush1.bf16.msra.mxu0 %v809
    %844 = vmatprep.subr.bf16.mxu0 0
    %845 = vmatpush1.bf16.msra.mxu0 %v808
    %846 = vmatprep.subr.bf16.mxu0 0
    %847 = vmatpush1.bf16.msra.mxu0 %v807
    %848 = vmatprep.subr.bf16.mxu0 0
    %849 = vmatpush2.bf16.msra.mxu0 %v822
    %850 = vmatprep.subr.bf16.mxu0 0
    %851 = vmatpush2.bf16.msra.mxu0 %v821
    %852 = vmatprep.subr.bf16.mxu0 0
    %853 = vmatpush2.bf16.msra.mxu0 %v820
    %854 = vmatprep.subr.bf16.mxu0 0
    %855 = vmatpush2.bf16.msra.mxu0 %v819
    %856 = vmatprep.subr.bf16.mxu0 0
    %857 = vmatpush2.bf16.msra.mxu0 %v818
    %858 = vmatprep.subr.bf16.mxu0 0
    %859 = vmatpush2.bf16.msra.mxu0 %v817
    %860 = vmatprep.subr.bf16.mxu0 0
    %861 = vmatpush2.bf16.msra.mxu0 %v816
    %862 = vmatprep.subr.bf16.mxu0 0
    %863 = vmatpush2.bf16.msra.mxu0 %v815
    %864 = vmatprep.mubr.bf16.mxu0 %v211
    %865 = vmatmul.mubr.bf16.gmra.mxu0 %v210
    %v866 = vpop.f32.mrf.mxu0
    %v867 = vadd.f32 0.0, %v866
    %v868 = vpop.f32.mrf.mxu0
    %v869 = vpop.f32.mrf.mxu0
    %v870 = vadd.f32 0.0, %v869
    %v871 = vpop.f32.mrf.mxu0
    %872 = vmatprep.mubr.bf16.mxu0 %v213
    %873 = vmatmul.mubr.bf16.gmra.mxu0 %v212
    %v874 = vpop.f32.mrf.mxu0
    %v875 = vadd.f32 0.0, %v874
    %v876 = vpop.f32.mrf.mxu0
    %v877 = vpop.f32.mrf.mxu0
    %v878 = vadd.f32 0.0, %v877
    %v879 = vpop.f32.mrf.mxu0
    %880 = vmatprep.mubr.bf16.mxu0 %v215
    %881 = vmatmul.mubr.bf16.gmra.mxu0 %v214
    %v882 = vpop.f32.mrf.mxu0
    %v883 = vadd.f32 0.0, %v882
    %v884 = vpop.f32.mrf.mxu0
    %v885 = vpop.f32.mrf.mxu0
    %v886 = vadd.f32 0.0, %v885
    %v887 = vpop.f32.mrf.mxu0
    %888 = vmatprep.mubr.bf16.mxu0 %v217
    %889 = vmatmul.mubr.bf16.gmra.mxu0 %v216
    %v890 = vpop.f32.mrf.mxu0
    %v891 = vadd.f32 0.0, %v890
    %v892 = vpop.f32.mrf.mxu0
    %v893 = vpop.f32.mrf.mxu0
    %v894 = vadd.f32 0.0, %v893
    %v895 = vpop.f32.mrf.mxu0
    %896 = vmatprep.mubr.bf16.mxu0 %v219
    %897 = vmatmul.mubr.bf16.gmra.mxu0 %v218
    %v898 = vpop.f32.mrf.mxu0
    %v899 = vadd.f32 0.0, %v898
    %v900 = vpop.f32.mrf.mxu0
    %v901 = vpop.f32.mrf.mxu0
    %v902 = vadd.f32 0.0, %v901
    %v903 = vpop.f32.mrf.mxu0
    %904 = vmatprep.mubr.bf16.mxu0 %v221
    %905 = vmatmul.mubr.bf16.gmra.mxu0 %v220
    %v906 = vpop.f32.mrf.mxu0
    %v907 = vadd.f32 0.0, %v906
    %v908 = vpop.f32.mrf.mxu0
    %v909 = vpop.f32.mrf.mxu0
    %v910 = vadd.f32 0.0, %v909
    %v911 = vpop.f32.mrf.mxu0
    %912 = vmatprep.mubr.bf16.mxu0 %v223
    %913 = vmatmul.mubr.bf16.gmra.mxu0 %v222
    %v914 = vpop.f32.mrf.mxu0
    %v915 = vadd.f32 0.0, %v914
    %v916 = vpop.f32.mrf.mxu0
    %v917 = vpop.f32.mrf.mxu0
    %v918 = vadd.f32 0.0, %v917
    %v919 = vpop.f32.mrf.mxu0
    %920 = vmatprep.mubr.bf16.mxu0 %v225
    %921 = vmatmul.mubr.bf16.gmra.mxu0 %v224
    %v922 = vpop.f32.mrf.mxu0
    %v923 = vadd.f32 0.0, %v922
    %v924 = vpop.f32.mrf.mxu0
    %v925 = vpop.f32.mrf.mxu0
    %v926 = vadd.f32 0.0, %v925
    %v927 = vpop.f32.mrf.mxu0
    %928 = vmatprep.mubr.bf16.mxu0 %v227
    %929 = vmatmul.mubr.bf16.gmra.mxu0 %v226
    %v930 = vpop.f32.mrf.mxu0
    %v931 = vadd.f32 0.0, %v930
    %v932 = vpop.f32.mrf.mxu0
    %v933 = vpop.f32.mrf.mxu0
    %v934 = vadd.f32 0.0, %v933
    %v935 = vpop.f32.mrf.mxu0
    %936 = vmatprep.mubr.bf16.mxu0 %v229
    %937 = vmatmul.mubr.bf16.gmra.mxu0 %v228
    %v938 = vpop.f32.mrf.mxu0
    %v939 = vadd.f32 0.0, %v938
    %v940 = vpop.f32.mrf.mxu0
    %v941 = vpop.f32.mrf.mxu0
    %v942 = vadd.f32 0.0, %v941
    %v943 = vpop.f32.mrf.mxu0
    %944 = vmatprep.mubr.bf16.mxu0 %v231
    %945 = vmatmul.mubr.bf16.gmra.mxu0 %v230
    %v946 = vpop.f32.mrf.mxu0
    %v947 = vadd.f32 0.0, %v946
    %v948 = vpop.f32.mrf.mxu0
    %v949 = vpop.f32.mrf.mxu0
    %v950 = vadd.f32 0.0, %v949
    %v951 = vpop.f32.mrf.mxu0
    %952 = vmatprep.mubr.bf16.mxu0 %v233
    %953 = vmatmul.mubr.bf16.gmra.mxu0 %v232
    %v954 = vpop.f32.mrf.mxu0
    %v955 = vadd.f32 0.0, %v954
    %v956 = vpop.f32.mrf.mxu0
    %v957 = vpop.f32.mrf.mxu0
    %v958 = vadd.f32 0.0, %v957
    %v959 = vpop.f32.mrf.mxu0
    %960 = vmatprep.mubr.bf16.mxu0 %v235
    %961 = vmatmul.mubr.bf16.gmra.mxu0 %v234
    %v962 = vpop.f32.mrf.mxu0
    %v963 = vadd.f32 0.0, %v962
    %v964 = vpop.f32.mrf.mxu0
    %v965 = vpop.f32.mrf.mxu0
    %v966 = vadd.f32 0.0, %v965
    %v967 = vpop.f32.mrf.mxu0
    %968 = vmatprep.mubr.bf16.mxu0 %v237
    %969 = vmatmul.mubr.bf16.gmra.mxu0 %v236
    %v970 = vpop.f32.mrf.mxu0
    %v971 = vadd.f32 0.0, %v970
    %v972 = vpop.f32.mrf.mxu0
    %v973 = vpop.f32.mrf.mxu0
    %v974 = vadd.f32 0.0, %v973
    %v975 = vpop.f32.mrf.mxu0
    %976 = vmatprep.mubr.bf16.mxu0 %v239
    %977 = vmatmul.mubr.bf16.gmra.mxu0 %v238
    %v978 = vpop.f32.mrf.mxu0
    %v979 = vadd.f32 0.0, %v978
    %v980 = vpop.f32.mrf.mxu0
    %v981 = vpop.f32.mrf.mxu0
    %v982 = vadd.f32 0.0, %v981
    %v983 = vpop.f32.mrf.mxu0
    %984 = vmatprep.mubr.bf16.mxu0 %v241
    %985 = vmatmul.mubr.bf16.gmra.mxu0 %v240
    %v986 = vpop.f32.mrf.mxu0
    %v987 = vadd.f32 0.0, %v986
    %v988 = vpop.f32.mrf.mxu0
    %v989 = vpop.f32.mrf.mxu0
    %v990 = vadd.f32 0.0, %v989
    %v991 = vpop.f32.mrf.mxu0
    %992 = vdwg.mxu0
    %v993 = vpack.c.bf16 %v870, %v867
    %v994 = vpack.c.bf16 %v878, %v875
    %v995 = vpack.c.bf16 %v886, %v883
    %v996 = vpack.c.bf16 %v894, %v891
    %v997 = vpack.c.bf16 %v902, %v899
    %v998 = vpack.c.bf16 %v910, %v907
    %v999 = vpack.c.bf16 %v918, %v915
    %v1000 = vpack.c.bf16 %v926, %v923
    %v1001 = vpack.c.bf16 %v934, %v931
    %v1002 = vpack.c.bf16 %v942, %v939
    %v1003 = vpack.c.bf16 %v950, %v947
    %v1004 = vpack.c.bf16 %v958, %v955
    %v1005 = vpack.c.bf16 %v966, %v963
    %v1006 = vpack.c.bf16 %v974, %v971
    %v1007 = vpack.c.bf16 %v982, %v979
    %v1008 = vpack.c.bf16 %v990, %v987
    %v1010 = vlaneseq
    %v1011 = vshrl.u32 %v1010, 7
    %v1012 = vsub.s32 0, %v1011
    %v1013 = vrot.slane %v831, %v1012
    %v1023 = vunpack.c.l.b16 %v823
    %v1024 = vunpack.c.l.b16 %v824
    %v1025 = vunpack.c.l.b16 %v825
    %v1026 = vunpack.c.l.b16 %v826
    %v1027 = vunpack.c.l.b16 %v827
    %v1028 = vunpack.c.l.b16 %v828
    %v1029 = vunpack.c.l.b16 %v829
    %v1030 = vunpack.c.l.b16 %v830
    %v1031 = vpack.c.b16 %v1024, %v1023
    %v1032 = vpack.c.b16 %v1026, %v1025
    %v1033 = vpack.c.b16 %v1028, %v1027
    %v1034 = vpack.c.b16 %v1030, %v1029
    %vm1039 = vcmask 523264
    %v1041 = vsel %vm1039, %v993, 0
    %v1044 = vsel %vm1039, %v994, 0
    %v1047 = vsel %vm1039, %v995, 0
    %v1050 = vsel %vm1039, %v996, 0
    %v1053 = vsel %vm1039, %v997, 0
    %v1056 = vsel %vm1039, %v998, 0
    %v1059 = vsel %vm1039, %v999, 0
    %v1062 = vsel %vm1039, %v1000, 0
    %v1065 = vsel %vm1039, %v1001, 0
    %v1068 = vsel %vm1039, %v1002, 0
    %v1071 = vsel %vm1039, %v1003, 0
    %v1074 = vsel %vm1039, %v1004, 0
    %v1077 = vsel %vm1039, %v1005, 0
    %v1080 = vsel %vm1039, %v1006, 0
    %v1083 = vsel %vm1039, %v1007, 0
    %v1086 = vsel %vm1039, %v1008, 0
    %1088 = vmatprep.subr.bf16.mxu0 0
    %1089 = vmatpush1.bf16.msra.mxu0 0
    %1090 = vmatprep.subr.bf16.mxu0 0
    %1091 = vmatpush1.bf16.msra.mxu0 0
    %1092 = vmatprep.subr.bf16.mxu0 0
    %1093 = vmatpush1.bf16.msra.mxu0 0
    %1094 = vmatprep.subr.bf16.mxu0 0
    %1095 = vmatpush1.bf16.msra.mxu0 0
    %1096 = vmatprep.subr.bf16.mxu0 0
    %1097 = vmatpush1.bf16.msra.mxu0 %v1034
    %1098 = vmatprep.subr.bf16.mxu0 0
    %1099 = vmatpush1.bf16.msra.mxu0 %v1033
    %1100 = vmatprep.subr.bf16.mxu0 0
    %1101 = vmatpush1.bf16.msra.mxu0 %v1032
    %1102 = vmatprep.subr.bf16.mxu0 0
    %1103 = vmatpush1.bf16.msra.mxu0 %v1031
    %1104 = vmatprep.subr.bf16.mxu0 0
    %1105 = vmatpush2.bf16.msra.mxu0 0
    %1106 = vmatprep.subr.bf16.mxu0 0
    %1107 = vmatpush2.bf16.msra.mxu0 0
    %1108 = vmatprep.subr.bf16.mxu0 0
    %1109 = vmatpush2.bf16.msra.mxu0 0
    %1110 = vmatprep.subr.bf16.mxu0 0
    %1111 = vmatpush2.bf16.msra.mxu0 0
    %1112 = vmatprep.subr.bf16.mxu0 0
    %1113 = vmatpush2.bf16.msra.mxu0 0
    %1114 = vmatprep.subr.bf16.mxu0 0
    %1115 = vmatpush2.bf16.msra.mxu0 0
    %1116 = vmatprep.subr.bf16.mxu0 0
    %1117 = vmatpush2.bf16.msra.mxu0 0
    %1118 = vmatprep.subr.bf16.mxu0 0
    %1119 = vmatpush2.bf16.msra.mxu0 0
    %1120 = vmatprep.mubr.bf16.mxu0 0
    %1121 = vmatmul.mubr.bf16.gmra.mxu0 %v1041
    %v1122 = vpop.f32.mrf.mxu0
    %v1123 = vadd.f32 %v1013, %v1122
    %v1124 = vpop.f32.mrf.mxu0
    %v1125 = vpop.f32.mrf.mxu0
    %v1126 = vadd.f32 %v1013, %v1125
    %v1127 = vpop.f32.mrf.mxu0
    %1128 = vmatprep.mubr.bf16.mxu0 0
    %1129 = vmatmul.mubr.bf16.gmra.mxu0 %v1044
    %v1130 = vpop.f32.mrf.mxu0
    %v1131 = vadd.f32 %v1013, %v1130
    %v1132 = vpop.f32.mrf.mxu0
    %v1133 = vpop.f32.mrf.mxu0
    %v1134 = vadd.f32 %v1013, %v1133
    %v1135 = vpop.f32.mrf.mxu0
    %1136 = vmatprep.mubr.bf16.mxu0 0
    %1137 = vmatmul.mubr.bf16.gmra.mxu0 %v1047
    %v1138 = vpop.f32.mrf.mxu0
    %v1139 = vadd.f32 %v1013, %v1138
    %v1140 = vpop.f32.mrf.mxu0
    %v1141 = vpop.f32.mrf.mxu0
    %v1142 = vadd.f32 %v1013, %v1141
    %v1143 = vpop.f32.mrf.mxu0
    %1144 = vmatprep.mubr.bf16.mxu0 0
    %1145 = vmatmul.mubr.bf16.gmra.mxu0 %v1050
    %v1146 = vpop.f32.mrf.mxu0
    %v1147 = vadd.f32 %v1013, %v1146
    %v1148 = vpop.f32.mrf.mxu0
    %v1149 = vpop.f32.mrf.mxu0
    %v1150 = vadd.f32 %v1013, %v1149
    %v1151 = vpop.f32.mrf.mxu0
    %1152 = vmatprep.mubr.bf16.mxu0 0
    %1153 = vmatmul.mubr.bf16.gmra.mxu0 %v1053
    %v1154 = vpop.f32.mrf.mxu0
    %v1155 = vadd.f32 %v1013, %v1154
    %v1156 = vpop.f32.mrf.mxu0
    %v1157 = vpop.f32.mrf.mxu0
    %v1158 = vadd.f32 %v1013, %v1157
    %v1159 = vpop.f32.mrf.mxu0
    %1160 = vmatprep.mubr.bf16.mxu0 0
    %1161 = vmatmul.mubr.bf16.gmra.mxu0 %v1056
    %v1162 = vpop.f32.mrf.mxu0
    %v1163 = vadd.f32 %v1013, %v1162
    %v1164 = vpop.f32.mrf.mxu0
    %v1165 = vpop.f32.mrf.mxu0
    %v1166 = vadd.f32 %v1013, %v1165
    %v1167 = vpop.f32.mrf.mxu0
    %1168 = vmatprep.mubr.bf16.mxu0 0
    %1169 = vmatmul.mubr.bf16.gmra.mxu0 %v1059
    %v1170 = vpop.f32.mrf.mxu0
    %v1171 = vadd.f32 %v1013, %v1170
    %v1172 = vpop.f32.mrf.mxu0
    %v1173 = vpop.f32.mrf.mxu0
    %v1174 = vadd.f32 %v1013, %v1173
    %v1175 = vpop.f32.mrf.mxu0
    %1176 = vmatprep.mubr.bf16.mxu0 0
    %1177 = vmatmul.mubr.bf16.gmra.mxu0 %v1062
    %v1178 = vpop.f32.mrf.mxu0
    %v1179 = vadd.f32 %v1013, %v1178
    %v1180 = vpop.f32.mrf.mxu0
    %v1181 = vpop.f32.mrf.mxu0
    %v1182 = vadd.f32 %v1013, %v1181
    %v1183 = vpop.f32.mrf.mxu0
    %1184 = vmatprep.mubr.bf16.mxu0 0
    %1185 = vmatmul.mubr.bf16.gmra.mxu0 %v1065
    %v1186 = vpop.f32.mrf.mxu0
    %v1187 = vadd.f32 %v1013, %v1186
    %v1188 = vpop.f32.mrf.mxu0
    %v1189 = vpop.f32.mrf.mxu0
    %v1190 = vadd.f32 %v1013, %v1189
    %v1191 = vpop.f32.mrf.mxu0
    %1192 = vmatprep.mubr.bf16.mxu0 0
    %1193 = vmatmul.mubr.bf16.gmra.mxu0 %v1068
    %v1194 = vpop.f32.mrf.mxu0
    %v1195 = vadd.f32 %v1013, %v1194
    %v1196 = vpop.f32.mrf.mxu0
    %v1197 = vpop.f32.mrf.mxu0
    %v1198 = vadd.f32 %v1013, %v1197
    %v1199 = vpop.f32.mrf.mxu0
    %1200 = vmatprep.mubr.bf16.mxu0 0
    %1201 = vmatmul.mubr.bf16.gmra.mxu0 %v1071
    %v1202 = vpop.f32.mrf.mxu0
    %v1203 = vadd.f32 %v1013, %v1202
    %v1204 = vpop.f32.mrf.mxu0
    %v1205 = vpop.f32.mrf.mxu0
    %v1206 = vadd.f32 %v1013, %v1205
    %v1207 = vpop.f32.mrf.mxu0
    %1208 = vmatprep.mubr.bf16.mxu0 0
    %1209 = vmatmul.mubr.bf16.gmra.mxu0 %v1074
    %v1210 = vpop.f32.mrf.mxu0
    %v1211 = vadd.f32 %v1013, %v1210
    %v1212 = vpop.f32.mrf.mxu0
    %v1213 = vpop.f32.mrf.mxu0
    %v1214 = vadd.f32 %v1013, %v1213
    %v1215 = vpop.f32.mrf.mxu0
    %1216 = vmatprep.mubr.bf16.mxu0 0
    %1217 = vmatmul.mubr.bf16.gmra.mxu0 %v1077
    %v1218 = vpop.f32.mrf.mxu0
    %v1219 = vadd.f32 %v1013, %v1218
    %v1220 = vpop.f32.mrf.mxu0
    %v1221 = vpop.f32.mrf.mxu0
    %v1222 = vadd.f32 %v1013, %v1221
    %v1223 = vpop.f32.mrf.mxu0
    %1224 = vmatprep.mubr.bf16.mxu0 0
    %1225 = vmatmul.mubr.bf16.gmra.mxu0 %v1080
    %v1226 = vpop.f32.mrf.mxu0
    %v1227 = vadd.f32 %v1013, %v1226
    %v1228 = vpop.f32.mrf.mxu0
    %v1229 = vpop.f32.mrf.mxu0
    %v1230 = vadd.f32 %v1013, %v1229
    %v1231 = vpop.f32.mrf.mxu0
    %1232 = vmatprep.mubr.bf16.mxu0 0
    %1233 = vmatmul.mubr.bf16.gmra.mxu0 %v1083
    %v1234 = vpop.f32.mrf.mxu0
    %v1235 = vadd.f32 %v1013, %v1234
    %v1236 = vpop.f32.mrf.mxu0
    %v1237 = vpop.f32.mrf.mxu0
    %v1238 = vadd.f32 %v1013, %v1237
    %v1239 = vpop.f32.mrf.mxu0
    %1240 = vmatprep.mubr.bf16.mxu0 0
    %1241 = vmatmul.mubr.bf16.gmra.mxu0 %v1086
    %v1242 = vpop.f32.mrf.mxu0
    %v1243 = vadd.f32 %v1013, %v1242
    %v1244 = vpop.f32.mrf.mxu0
    %v1245 = vpop.f32.mrf.mxu0
    %v1246 = vadd.f32 %v1013, %v1245
    %v1247 = vpop.f32.mrf.mxu0
    %1248 = vdwg.mxu0
    %v1249 = vmax.f32 %v1123, 0.0
    %v1250 = vmax.f32 %v1126, 0.0
    %v1251 = vmax.f32 %v1131, 0.0
    %v1252 = vmax.f32 %v1134, 0.0
    %v1253 = vmax.f32 %v1139, 0.0
    %v1254 = vmax.f32 %v1142, 0.0
    %v1255 = vmax.f32 %v1147, 0.0
    %v1256 = vmax.f32 %v1150, 0.0
    %v1257 = vmax.f32 %v1155, 0.0
    %v1258 = vmax.f32 %v1158, 0.0
    %v1259 = vmax.f32 %v1163, 0.0
    %v1260 = vmax.f32 %v1166, 0.0
    %v1261 = vmax.f32 %v1171, 0.0
    %v1262 = vmax.f32 %v1174, 0.0
    %v1263 = vmax.f32 %v1179, 0.0
    %v1264 = vmax.f32 %v1182, 0.0
    %v1265 = vmax.f32 %v1187, 0.0
    %v1266 = vmax.f32 %v1190, 0.0
    %v1267 = vmax.f32 %v1195, 0.0
    %v1268 = vmax.f32 %v1198, 0.0
    %v1269 = vmax.f32 %v1203, 0.0
    %v1270 = vmax.f32 %v1206, 0.0
    %v1271 = vmax.f32 %v1211, 0.0
    %v1272 = vmax.f32 %v1214, 0.0
    %v1273 = vmax.f32 %v1219, 0.0
    %v1274 = vmax.f32 %v1222, 0.0
    %v1275 = vmax.f32 %v1227, 0.0
    %v1276 = vmax.f32 %v1230, 0.0
    %v1277 = vmax.f32 %v1235, 0.0
    %v1278 = vmax.f32 %v1238, 0.0
    %v1279 = vmax.f32 %v1243, 0.0
    %v1280 = vmax.f32 %v1246, 0.0
    %v1281 = vpack.c.bf16 %v1250, %v1249
    %v1282 = vpack.c.bf16 %v1252, %v1251
    %v1283 = vpack.c.bf16 %v1254, %v1253
    %v1284 = vpack.c.bf16 %v1256, %v1255
    %v1285 = vpack.c.bf16 %v1258, %v1257
    %v1286 = vpack.c.bf16 %v1260, %v1259
    %v1287 = vpack.c.bf16 %v1262, %v1261
    %v1288 = vpack.c.bf16 %v1264, %v1263
    %v1289 = vpack.c.bf16 %v1266, %v1265
    %v1290 = vpack.c.bf16 %v1268, %v1267
    %v1291 = vpack.c.bf16 %v1270, %v1269
    %v1292 = vpack.c.bf16 %v1272, %v1271
    %v1293 = vpack.c.bf16 %v1274, %v1273
    %v1294 = vpack.c.bf16 %v1276, %v1275
    %v1295 = vpack.c.bf16 %v1278, %v1277
    %v1296 = vpack.c.bf16 %v1280, %v1279
    %v1297 = vld [vmem:[%s6] sm:$0xf]
    %v1298 = vld [vmem:[%s6 + $0x4] sm:$0xf]
    %v1299 = vld [vmem:[%s6 + $0x8] sm:$0xf]
    %v1300 = vld [vmem:[%s6 + $0xc] sm:$0xf]
    %v1301 = vld [vmem:[%s6 + $0x10] sm:$0xf]
    %v1302 = vld [vmem:[%s6 + $0x14] sm:$0xf]
    %v1303 = vld [vmem:[%s6 + $0x18] sm:$0xf]
    %v1304 = vld [vmem:[%s6 + $0x1c] sm:$0xf]
    %v1305 = vld [vmem:[%s7] sm:$0x1]
    %1306 = vmatprep.subr.bf16.mxu0 0
    %1307 = vmatpush1.bf16.msra.mxu0 %v1288
    %1308 = vmatprep.subr.bf16.mxu0 0
    %1309 = vmatpush1.bf16.msra.mxu0 %v1287
    %1310 = vmatprep.subr.bf16.mxu0 0
    %1311 = vmatpush1.bf16.msra.mxu0 %v1286
    %1312 = vmatprep.subr.bf16.mxu0 0
    %1313 = vmatpush1.bf16.msra.mxu0 %v1285
    %1314 = vmatprep.subr.bf16.mxu0 0
    %1315 = vmatpush1.bf16.msra.mxu0 %v1284
    %1316 = vmatprep.subr.bf16.mxu0 0
    %1317 = vmatpush1.bf16.msra.mxu0 %v1283
    %1318 = vmatprep.subr.bf16.mxu0 0
    %1319 = vmatpush1.bf16.msra.mxu0 %v1282
    %1320 = vmatprep.subr.bf16.mxu0 0
    %1321 = vmatpush1.bf16.msra.mxu0 %v1281
    %1322 = vmatprep.subr.bf16.mxu0 0
    %1323 = vmatpush2.bf16.msra.mxu0 %v1296
    %1324 = vmatprep.subr.bf16.mxu0 0
    %1325 = vmatpush2.bf16.msra.mxu0 %v1295
    %1326 = vmatprep.subr.bf16.mxu0 0
    %1327 = vmatpush2.bf16.msra.mxu0 %v1294
    %1328 = vmatprep.subr.bf16.mxu0 0
    %1329 = vmatpush2.bf16.msra.mxu0 %v1293
    %1330 = vmatprep.subr.bf16.mxu0 0
    %1331 = vmatpush2.bf16.msra.mxu0 %v1292
    %1332 = vmatprep.subr.bf16.mxu0 0
    %1333 = vmatpush2.bf16.msra.mxu0 %v1291
    %1334 = vmatprep.subr.bf16.mxu0 0
    %1335 = vmatpush2.bf16.msra.mxu0 %v1290
    %1336 = vmatprep.subr.bf16.mxu0 0
    %1337 = vmatpush2.bf16.msra.mxu0 %v1289
    %1338 = vmatprep.mubr.bf16.mxu0 %v211
    %1339 = vmatmul.mubr.bf16.gmra.mxu0 %v210
    %v1340 = vpop.f32.mrf.mxu0
    %v1341 = vadd.f32 0.0, %v1340
    %v1342 = vpop.f32.mrf.mxu0
    %v1343 = vpop.f32.mrf.mxu0
    %v1344 = vadd.f32 0.0, %v1343
    %v1345 = vpop.f32.mrf.mxu0
    %1346 = vmatprep.mubr.bf16.mxu0 %v213
    %1347 = vmatmul.mubr.bf16.gmra.mxu0 %v212
    %v1348 = vpop.f32.mrf.mxu0
    %v1349 = vadd.f32 0.0, %v1348
    %v1350 = vpop.f32.mrf.mxu0
    %v1351 = vpop.f32.mrf.mxu0
    %v1352 = vadd.f32 0.0, %v1351
    %v1353 = vpop.f32.mrf.mxu0
    %1354 = vmatprep.mubr.bf16.mxu0 %v215
    %1355 = vmatmul.mubr.bf16.gmra.mxu0 %v214
    %v1356 = vpop.f32.mrf.mxu0
    %v1357 = vadd.f32 0.0, %v1356
    %v1358 = vpop.f32.mrf.mxu0
    %v1359 = vpop.f32.mrf.mxu0
    %v1360 = vadd.f32 0.0, %v1359
    %v1361 = vpop.f32.mrf.mxu0
    %1362 = vmatprep.mubr.bf16.mxu0 %v217
    %1363 = vmatmul.mubr.bf16.gmra.mxu0 %v216
    %v1364 = vpop.f32.mrf.mxu0
    %v1365 = vadd.f32 0.0, %v1364
    %v1366 = vpop.f32.mrf.mxu0
    %v1367 = vpop.f32.mrf.mxu0
    %v1368 = vadd.f32 0.0, %v1367
    %v1369 = vpop.f32.mrf.mxu0
    %1370 = vmatprep.mubr.bf16.mxu0 %v219
    %1371 = vmatmul.mubr.bf16.gmra.mxu0 %v218
    %v1372 = vpop.f32.mrf.mxu0
    %v1373 = vadd.f32 0.0, %v1372
    %v1374 = vpop.f32.mrf.mxu0
    %v1375 = vpop.f32.mrf.mxu0
    %v1376 = vadd.f32 0.0, %v1375
    %v1377 = vpop.f32.mrf.mxu0
    %1378 = vmatprep.mubr.bf16.mxu0 %v221
    %1379 = vmatmul.mubr.bf16.gmra.mxu0 %v220
    %v1380 = vpop.f32.mrf.mxu0
    %v1381 = vadd.f32 0.0, %v1380
    %v1382 = vpop.f32.mrf.mxu0
    %v1383 = vpop.f32.mrf.mxu0
    %v1384 = vadd.f32 0.0, %v1383
    %v1385 = vpop.f32.mrf.mxu0
    %1386 = vmatprep.mubr.bf16.mxu0 %v223
    %1387 = vmatmul.mubr.bf16.gmra.mxu0 %v222
    %v1388 = vpop.f32.mrf.mxu0
    %v1389 = vadd.f32 0.0, %v1388
    %v1390 = vpop.f32.mrf.mxu0
    %v1391 = vpop.f32.mrf.mxu0
    %v1392 = vadd.f32 0.0, %v1391
    %v1393 = vpop.f32.mrf.mxu0
    %1394 = vmatprep.mubr.bf16.mxu0 %v225
    %1395 = vmatmul.mubr.bf16.gmra.mxu0 %v224
    %v1396 = vpop.f32.mrf.mxu0
    %v1397 = vadd.f32 0.0, %v1396
    %v1398 = vpop.f32.mrf.mxu0
    %v1399 = vpop.f32.mrf.mxu0
    %v1400 = vadd.f32 0.0, %v1399
    %v1401 = vpop.f32.mrf.mxu0
    %1402 = vmatprep.mubr.bf16.mxu0 %v227
    %1403 = vmatmul.mubr.bf16.gmra.mxu0 %v226
    %v1404 = vpop.f32.mrf.mxu0
    %v1405 = vadd.f32 0.0, %v1404
    %v1406 = vpop.f32.mrf.mxu0
    %v1407 = vpop.f32.mrf.mxu0
    %v1408 = vadd.f32 0.0, %v1407
    %v1409 = vpop.f32.mrf.mxu0
    %1410 = vmatprep.mubr.bf16.mxu0 %v229
    %1411 = vmatmul.mubr.bf16.gmra.mxu0 %v228
    %v1412 = vpop.f32.mrf.mxu0
    %v1413 = vadd.f32 0.0, %v1412
    %v1414 = vpop.f32.mrf.mxu0
    %v1415 = vpop.f32.mrf.mxu0
    %v1416 = vadd.f32 0.0, %v1415
    %v1417 = vpop.f32.mrf.mxu0
    %1418 = vmatprep.mubr.bf16.mxu0 %v231
    %1419 = vmatmul.mubr.bf16.gmra.mxu0 %v230
    %v1420 = vpop.f32.mrf.mxu0
    %v1421 = vadd.f32 0.0, %v1420
    %v1422 = vpop.f32.mrf.mxu0
    %v1423 = vpop.f32.mrf.mxu0
    %v1424 = vadd.f32 0.0, %v1423
    %v1425 = vpop.f32.mrf.mxu0
    %1426 = vmatprep.mubr.bf16.mxu0 %v233
    %1427 = vmatmul.mubr.bf16.gmra.mxu0 %v232
    %v1428 = vpop.f32.mrf.mxu0
    %v1429 = vadd.f32 0.0, %v1428
    %v1430 = vpop.f32.mrf.mxu0
    %v1431 = vpop.f32.mrf.mxu0
    %v1432 = vadd.f32 0.0, %v1431
    %v1433 = vpop.f32.mrf.mxu0
    %1434 = vmatprep.mubr.bf16.mxu0 %v235
    %1435 = vmatmul.mubr.bf16.gmra.mxu0 %v234
    %v1436 = vpop.f32.mrf.mxu0
    %v1437 = vadd.f32 0.0, %v1436
    %v1438 = vpop.f32.mrf.mxu0
    %v1439 = vpop.f32.mrf.mxu0
    %v1440 = vadd.f32 0.0, %v1439
    %v1441 = vpop.f32.mrf.mxu0
    %1442 = vmatprep.mubr.bf16.mxu0 %v237
    %1443 = vmatmul.mubr.bf16.gmra.mxu0 %v236
    %v1444 = vpop.f32.mrf.mxu0
    %v1445 = vadd.f32 0.0, %v1444
    %v1446 = vpop.f32.mrf.mxu0
    %v1447 = vpop.f32.mrf.mxu0
    %v1448 = vadd.f32 0.0, %v1447
    %v1449 = vpop.f32.mrf.mxu0
    %1450 = vmatprep.mubr.bf16.mxu0 %v239
    %1451 = vmatmul.mubr.bf16.gmra.mxu0 %v238
    %v1452 = vpop.f32.mrf.mxu0
    %v1453 = vadd.f32 0.0, %v1452
    %v1454 = vpop.f32.mrf.mxu0
    %v1455 = vpop.f32.mrf.mxu0
    %v1456 = vadd.f32 0.0, %v1455
    %v1457 = vpop.f32.mrf.mxu0
    %1458 = vmatprep.mubr.bf16.mxu0 %v241
    %1459 = vmatmul.mubr.bf16.gmra.mxu0 %v240
    %v1460 = vpop.f32.mrf.mxu0
    %v1461 = vadd.f32 0.0, %v1460
    %v1462 = vpop.f32.mrf.mxu0
    %v1463 = vpop.f32.mrf.mxu0
    %v1464 = vadd.f32 0.0, %v1463
    %v1465 = vpop.f32.mrf.mxu0
    %1466 = vdwg.mxu0
    %v1467 = vpack.c.bf16 %v1344, %v1341
    %v1468 = vpack.c.bf16 %v1352, %v1349
    %v1469 = vpack.c.bf16 %v1360, %v1357
    %v1470 = vpack.c.bf16 %v1368, %v1365
    %v1471 = vpack.c.bf16 %v1376, %v1373
    %v1472 = vpack.c.bf16 %v1384, %v1381
    %v1473 = vpack.c.bf16 %v1392, %v1389
    %v1474 = vpack.c.bf16 %v1400, %v1397
    %v1475 = vpack.c.bf16 %v1408, %v1405
    %v1476 = vpack.c.bf16 %v1416, %v1413
    %v1477 = vpack.c.bf16 %v1424, %v1421
    %v1478 = vpack.c.bf16 %v1432, %v1429
    %v1479 = vpack.c.bf16 %v1440, %v1437
    %v1480 = vpack.c.bf16 %v1448, %v1445
    %v1481 = vpack.c.bf16 %v1456, %v1453
    %v1482 = vpack.c.bf16 %v1464, %v1461
    %v1484 = vlaneseq
    %v1485 = vshrl.u32 %v1484, 7
    %v1486 = vsub.s32 0, %v1485
    %v1487 = vrot.slane %v1305, %v1486
    %v1497 = vunpack.c.l.b16 %v1297
    %v1498 = vunpack.c.l.b16 %v1298
    %v1499 = vunpack.c.l.b16 %v1299
    %v1500 = vunpack.c.l.b16 %v1300
    %v1501 = vunpack.c.l.b16 %v1301
    %v1502 = vunpack.c.l.b16 %v1302
    %v1503 = vunpack.c.l.b16 %v1303
    %v1504 = vunpack.c.l.b16 %v1304
    %v1505 = vpack.c.b16 %v1498, %v1497
    %v1506 = vpack.c.b16 %v1500, %v1499
    %v1507 = vpack.c.b16 %v1502, %v1501
    %v1508 = vpack.c.b16 %v1504, %v1503
    %v1514 = vsel %vm1039, %v1467, 0
    %v1517 = vsel %vm1039, %v1468, 0
    %v1520 = vsel %vm1039, %v1469, 0
    %v1523 = vsel %vm1039, %v1470, 0
    %v1526 = vsel %vm1039, %v1471, 0
    %v1529 = vsel %vm1039, %v1472, 0
    %v1532 = vsel %vm1039, %v1473, 0
    %v1535 = vsel %vm1039, %v1474, 0
    %v1538 = vsel %vm1039, %v1475, 0
    %v1541 = vsel %vm1039, %v1476, 0
    %v1544 = vsel %vm1039, %v1477, 0
    %v1547 = vsel %vm1039, %v1478, 0
    %v1550 = vsel %vm1039, %v1479, 0
    %v1553 = vsel %vm1039, %v1480, 0
    %v1556 = vsel %vm1039, %v1481, 0
    %v1559 = vsel %vm1039, %v1482, 0
    %1561 = vmatprep.subr.bf16.mxu0 0
    %1562 = vmatpush1.bf16.msra.mxu0 0
    %1563 = vmatprep.subr.bf16.mxu0 0
    %1564 = vmatpush1.bf16.msra.mxu0 0
    %1565 = vmatprep.subr.bf16.mxu0 0
    %1566 = vmatpush1.bf16.msra.mxu0 0
    %1567 = vmatprep.subr.bf16.mxu0 0
    %1568 = vmatpush1.bf16.msra.mxu0 0
    %1569 = vmatprep.subr.bf16.mxu0 0
    %1570 = vmatpush1.bf16.msra.mxu0 %v1508
    %1571 = vmatprep.subr.bf16.mxu0 0
    %1572 = vmatpush1.bf16.msra.mxu0 %v1507
    %1573 = vmatprep.subr.bf16.mxu0 0
    %1574 = vmatpush1.bf16.msra.mxu0 %v1506
    %1575 = vmatprep.subr.bf16.mxu0 0
    %1576 = vmatpush1.bf16.msra.mxu0 %v1505
    %1577 = vmatprep.subr.bf16.mxu0 0
    %1578 = vmatpush2.bf16.msra.mxu0 0
    %1579 = vmatprep.subr.bf16.mxu0 0
    %1580 = vmatpush2.bf16.msra.mxu0 0
    %1581 = vmatprep.subr.bf16.mxu0 0
    %1582 = vmatpush2.bf16.msra.mxu0 0
    %1583 = vmatprep.subr.bf16.mxu0 0
    %1584 = vmatpush2.bf16.msra.mxu0 0
    %1585 = vmatprep.subr.bf16.mxu0 0
    %1586 = vmatpush2.bf16.msra.mxu0 0
    %1587 = vmatprep.subr.bf16.mxu0 0
    %1588 = vmatpush2.bf16.msra.mxu0 0
    %1589 = vmatprep.subr.bf16.mxu0 0
    %1590 = vmatpush2.bf16.msra.mxu0 0
    %1591 = vmatprep.subr.bf16.mxu0 0
    %1592 = vmatpush2.bf16.msra.mxu0 0
    %1593 = vmatprep.mubr.bf16.mxu0 0
    %1594 = vmatmul.mubr.bf16.gmra.mxu0 %v1514
    %v1595 = vpop.f32.mrf.mxu0
    %v1596 = vadd.f32 %v1487, %v1595
    %v1597 = vpop.f32.mrf.mxu0
    %v1598 = vpop.f32.mrf.mxu0
    %v1599 = vadd.f32 %v1487, %v1598
    %v1600 = vpop.f32.mrf.mxu0
    %1601 = vmatprep.mubr.bf16.mxu0 0
    %1602 = vmatmul.mubr.bf16.gmra.mxu0 %v1517
    %v1603 = vpop.f32.mrf.mxu0
    %v1604 = vadd.f32 %v1487, %v1603
    %v1605 = vpop.f32.mrf.mxu0
    %v1606 = vpop.f32.mrf.mxu0
    %v1607 = vadd.f32 %v1487, %v1606
    %v1608 = vpop.f32.mrf.mxu0
    %1609 = vmatprep.mubr.bf16.mxu0 0
    %1610 = vmatmul.mubr.bf16.gmra.mxu0 %v1520
    %v1611 = vpop.f32.mrf.mxu0
    %v1612 = vadd.f32 %v1487, %v1611
    %v1613 = vpop.f32.mrf.mxu0
    %v1614 = vpop.f32.mrf.mxu0
    %v1615 = vadd.f32 %v1487, %v1614
    %v1616 = vpop.f32.mrf.mxu0
    %1617 = vmatprep.mubr.bf16.mxu0 0
    %1618 = vmatmul.mubr.bf16.gmra.mxu0 %v1523
    %v1619 = vpop.f32.mrf.mxu0
    %v1620 = vadd.f32 %v1487, %v1619
    %v1621 = vpop.f32.mrf.mxu0
    %v1622 = vpop.f32.mrf.mxu0
    %v1623 = vadd.f32 %v1487, %v1622
    %v1624 = vpop.f32.mrf.mxu0
    %1625 = vmatprep.mubr.bf16.mxu0 0
    %1626 = vmatmul.mubr.bf16.gmra.mxu0 %v1526
    %v1627 = vpop.f32.mrf.mxu0
    %v1628 = vadd.f32 %v1487, %v1627
    %v1629 = vpop.f32.mrf.mxu0
    %v1630 = vpop.f32.mrf.mxu0
    %v1631 = vadd.f32 %v1487, %v1630
    %v1632 = vpop.f32.mrf.mxu0
    %1633 = vmatprep.mubr.bf16.mxu0 0
    %1634 = vmatmul.mubr.bf16.gmra.mxu0 %v1529
    %v1635 = vpop.f32.mrf.mxu0
    %v1636 = vadd.f32 %v1487, %v1635
    %v1637 = vpop.f32.mrf.mxu0
    %v1638 = vpop.f32.mrf.mxu0
    %v1639 = vadd.f32 %v1487, %v1638
    %v1640 = vpop.f32.mrf.mxu0
    %1641 = vmatprep.mubr.bf16.mxu0 0
    %1642 = vmatmul.mubr.bf16.gmra.mxu0 %v1532
    %v1643 = vpop.f32.mrf.mxu0
    %v1644 = vadd.f32 %v1487, %v1643
    %v1645 = vpop.f32.mrf.mxu0
    %v1646 = vpop.f32.mrf.mxu0
    %v1647 = vadd.f32 %v1487, %v1646
    %v1648 = vpop.f32.mrf.mxu0
    %1649 = vmatprep.mubr.bf16.mxu0 0
    %1650 = vmatmul.mubr.bf16.gmra.mxu0 %v1535
    %v1651 = vpop.f32.mrf.mxu0
    %v1652 = vadd.f32 %v1487, %v1651
    %v1653 = vpop.f32.mrf.mxu0
    %v1654 = vpop.f32.mrf.mxu0
    %v1655 = vadd.f32 %v1487, %v1654
    %v1656 = vpop.f32.mrf.mxu0
    %1657 = vmatprep.mubr.bf16.mxu0 0
    %1658 = vmatmul.mubr.bf16.gmra.mxu0 %v1538
    %v1659 = vpop.f32.mrf.mxu0
    %v1660 = vadd.f32 %v1487, %v1659
    %v1661 = vpop.f32.mrf.mxu0
    %v1662 = vpop.f32.mrf.mxu0
    %v1663 = vadd.f32 %v1487, %v1662
    %v1664 = vpop.f32.mrf.mxu0
    %1665 = vmatprep.mubr.bf16.mxu0 0
    %1666 = vmatmul.mubr.bf16.gmra.mxu0 %v1541
    %v1667 = vpop.f32.mrf.mxu0
    %v1668 = vadd.f32 %v1487, %v1667
    %v1669 = vpop.f32.mrf.mxu0
    %v1670 = vpop.f32.mrf.mxu0
    %v1671 = vadd.f32 %v1487, %v1670
    %v1672 = vpop.f32.mrf.mxu0
    %1673 = vmatprep.mubr.bf16.mxu0 0
    %1674 = vmatmul.mubr.bf16.gmra.mxu0 %v1544
    %v1675 = vpop.f32.mrf.mxu0
    %v1676 = vadd.f32 %v1487, %v1675
    %v1677 = vpop.f32.mrf.mxu0
    %v1678 = vpop.f32.mrf.mxu0
    %v1679 = vadd.f32 %v1487, %v1678
    %v1680 = vpop.f32.mrf.mxu0
    %1681 = vmatprep.mubr.bf16.mxu0 0
    %1682 = vmatmul.mubr.bf16.gmra.mxu0 %v1547
    %v1683 = vpop.f32.mrf.mxu0
    %v1684 = vadd.f32 %v1487, %v1683
    %v1685 = vpop.f32.mrf.mxu0
    %v1686 = vpop.f32.mrf.mxu0
    %v1687 = vadd.f32 %v1487, %v1686
    %v1688 = vpop.f32.mrf.mxu0
    %1689 = vmatprep.mubr.bf16.mxu0 0
    %1690 = vmatmul.mubr.bf16.gmra.mxu0 %v1550
    %v1691 = vpop.f32.mrf.mxu0
    %v1692 = vadd.f32 %v1487, %v1691
    %v1693 = vpop.f32.mrf.mxu0
    %v1694 = vpop.f32.mrf.mxu0
    %v1695 = vadd.f32 %v1487, %v1694
    %v1696 = vpop.f32.mrf.mxu0
    %1697 = vmatprep.mubr.bf16.mxu0 0
    %1698 = vmatmul.mubr.bf16.gmra.mxu0 %v1553
    %v1699 = vpop.f32.mrf.mxu0
    %v1700 = vadd.f32 %v1487, %v1699
    %v1701 = vpop.f32.mrf.mxu0
    %v1702 = vpop.f32.mrf.mxu0
    %v1703 = vadd.f32 %v1487, %v1702
    %v1704 = vpop.f32.mrf.mxu0
    %1705 = vmatprep.mubr.bf16.mxu0 0
    %1706 = vmatmul.mubr.bf16.gmra.mxu0 %v1556
    %v1707 = vpop.f32.mrf.mxu0
    %v1708 = vadd.f32 %v1487, %v1707
    %v1709 = vpop.f32.mrf.mxu0
    %v1710 = vpop.f32.mrf.mxu0
    %v1711 = vadd.f32 %v1487, %v1710
    %v1712 = vpop.f32.mrf.mxu0
    %1713 = vmatprep.mubr.bf16.mxu0 0
    %1714 = vmatmul.mubr.bf16.gmra.mxu0 %v1559
    %v1715 = vpop.f32.mrf.mxu0
    %v1716 = vadd.f32 %v1487, %v1715
    %v1717 = vpop.f32.mrf.mxu0
    %v1718 = vpop.f32.mrf.mxu0
    %v1719 = vadd.f32 %v1487, %v1718
    %v1720 = vpop.f32.mrf.mxu0
    %1721 = vdwg.mxu0
    %1722 = vst [vmem:[#allocation5] sm:$0xff] %v1596
    %1723 = vst [vmem:[#allocation5 + $0x8] sm:$0xff] %v1599
    %1724 = vst [vmem:[#allocation5 + $0x10] sm:$0xff] %v1604
    %1725 = vst [vmem:[#allocation5 + $0x18] sm:$0xff] %v1607
    %1726 = vst [vmem:[#allocation5 + $0x20] sm:$0xff] %v1612
    %1727 = vst [vmem:[#allocation5 + $0x28] sm:$0xff] %v1615
    %1728 = vst [vmem:[#allocation5 + $0x30] sm:$0xff] %v1620
    %1729 = vst [vmem:[#allocation5 + $0x38] sm:$0xff] %v1623
    %1730 = vst [vmem:[#allocation5 + $0x40] sm:$0xff] %v1628
    %1731 = vst [vmem:[#allocation5 + $0x48] sm:$0xff] %v1631
    %1732 = vst [vmem:[#allocation5 + $0x50] sm:$0xff] %v1636
    %1733 = vst [vmem:[#allocation5 + $0x58] sm:$0xff] %v1639
    %1734 = vst [vmem:[#allocation5 + $0x60] sm:$0xff] %v1644
    %1735 = vst [vmem:[#allocation5 + $0x68] sm:$0xff] %v1647
    %1736 = vst [vmem:[#allocation5 + $0x70] sm:$0xff] %v1652
    %1737 = vst [vmem:[#allocation5 + $0x78] sm:$0xff] %v1655
    %1738 = vst [vmem:[#allocation5 + $0x80] sm:$0xff] %v1660
    %1739 = vst [vmem:[#allocation5 + $0x88] sm:$0xff] %v1663
    %1740 = vst [vmem:[#allocation5 + $0x90] sm:$0xff] %v1668
    %1741 = vst [vmem:[#allocation5 + $0x98] sm:$0xff] %v1671
    %1742 = vst [vmem:[#allocation5 + $0xa0] sm:$0xff] %v1676
    %1743 = vst [vmem:[#allocation5 + $0xa8] sm:$0xff] %v1679
    %1744 = vst [vmem:[#allocation5 + $0xb0] sm:$0xff] %v1684
    %1745 = vst [vmem:[#allocation5 + $0xb8] sm:$0xff] %v1687
    %1746 = vst [vmem:[#allocation5 + $0xc0] sm:$0xff] %v1692
    %1747 = vst [vmem:[#allocation5 + $0xc8] sm:$0xff] %v1695
    %1748 = vst [vmem:[#allocation5 + $0xd0] sm:$0xff] %v1700
    %1749 = vst [vmem:[#allocation5 + $0xd8] sm:$0xff] %v1703
    %1750 = vst [vmem:[#allocation5 + $0xe0] sm:$0xff] %v1708
    %1751 = vst [vmem:[#allocation5 + $0xe8] sm:$0xff] %v1711
    %1752 = vst [vmem:[#allocation5 + $0xf0] sm:$0xff] %v1716
    %1753 = vst [vmem:[#allocation5 + $0xf8] sm:$0xff] %v1719
    // Predicated region
    $region38: #{tpu_custom_call.1} parent=1 // pred_check
      _
    $region39: #{tpu_custom_call.1} parent=1 // pred_check_branch
      %1755 = sbr.rel (0) target = $region41
    $region40: #{tpu_custom_call.1} parent=1 // pred_region
      %s1757 = ssub.s32 4096, 4096
      %1758 = vsyncadd [#allocation4], %s1757
      %s1759 = sshll.u32 [#allocation5], 4
      %s1760 = int_to_ptr.vmem [resolvable:$true] %s1759
      %1765 = dma.vmem_to_hbm [thread:$0]  %s1760, 4096, %s8, [#allocation4], 128, 128, 8
    $region41: #{tpu_custom_call.1} parent=1 // pred_fallthru
      _
    // Predicated region
    $region42: #{tpu_custom_call.1} parent=1 // pred_check
      _
    $region43: #{tpu_custom_call.1} parent=1 // pred_check_branch
      %1767 = sbr.rel (0) target = $region45
    $region44: #{tpu_custom_call.1} parent=1 // pred_region
      %1768 = dma.done [#allocation4], 4096
    $region45: #{tpu_custom_call.1} parent=1 // pred_fallthru
      _
    %1769 = vsyncpa [#allocation3], 1
    %1770 = vsyncpa [#allocation4], 1

</llo_original>
